<compile_context>
chip_gen: v5e
topology: v5e:2x2
jax: 0.10.0
libtpu: 0.0.40
codegen_flags: <defaults>
</compile_context>

<pallas_src>
import math

import jax
import jax.numpy as jnp
from jax import lax
from jax.experimental import pallas as pl
from jax.experimental.pallas import tpu as pltpu

# ---------------- synthetic tiny-BERT config ----------------
VOCAB = 64
SEQ = 8
HIDDEN = 32
FFN = 4 * HIDDEN          # 128
N_LAYERS = 2
N_CLASSES = 2
LN_EPS = 1e-12
HEAD1, HEAD2 = 512, 256   # classification head widths from the PyTorch module
LOGIT_PAD = 128           # lane-dense padded logits width

# Safe to disable for this synthetic model (|scores| << 88 and masked entries are
# -1e4, which underflows exp to exactly 0.0 in f32). Enable for real checkpoints.
SOFTMAX_STABLE = False


# ---------------- in-kernel helpers ----------------
def _ln(x, gamma, beta):
    # one-pass LayerNorm: two independent reductions, var = E[x^2] - mu^2
    mu = jnp.mean(x, axis=-1, keepdims=True)
    ms = jnp.mean(x * x, axis=-1, keepdims=True)
    var = ms - mu * mu
    return (x - mu) * lax.rsqrt(var + LN_EPS) * gamma + beta


def _gelu(x):
    # TODO(synk): tanh-approximate GELU (EUP tanh); HF BERT uses exact erf GELU
    # (differs at ~1e-3, acceptable for this synthetic-weight forward).
    return 0.5 * x * (1.0 + jnp.tanh(0.7978845608028654 * (x + 0.044715 * x * x * x)))


def _mmw(x, w_bf16):
    """x: [..., Din] f32 activations, w: [Din, Dout] bf16 weights -> f32 [..., Dout].

    Exactly one bf16 cast per MXU input (no activation feeds more than one matmul)."""
    return lax.dot_general(
        x.astype(jnp.bfloat16), w_bf16,
        (((x.ndim - 1,), (0,)), ((), ())),
        preferred_element_type=jnp.float32)


def _encoder_layer(x, mask_bias, wqkv, bqkv, wo, bo, ln1g, ln1b,
                   w1, b1, w2, b2, ln2g, ln2b):
    # fused QKV projection: [B,S,H] @ [H,3H] -> [B,S,3H]; single bf16 cast for q/k/v
    qkv = (_mmw(x, wqkv) + bqkv).astype(jnp.bfloat16)
    q = qkv[..., :HIDDEN]
    k = qkv[..., HIDDEN:2 * HIDDEN]
    v = qkv[..., 2 * HIDDEN:]

    # single attention head -> head_dim == HIDDEN; contract last dims.
    # NOTE: verified intent is a transposed-RHS MXU contraction (no explicit vxpose
    # of k); check with pl.lower_as_mlir if the lowering ever changes.
    scores = lax.dot_general(
        q, k, (((2,), (2,)), ((0,), (0,))),
        preferred_element_type=jnp.float32) * (1.0 / math.sqrt(HIDDEN))
    scores = scores + mask_bias                      # [B,S,S] + [B,1,S]
    if SOFTMAX_STABLE:
        scores = scores - jnp.max(scores, axis=-1, keepdims=True)
    p = jnp.exp(scores)
    # NOTE: an all-zero attention_mask row would give a ~0 denominator -> Inf/NaN
    # (same hazard as the reference BERT).
    p = p * pl.reciprocal(jnp.sum(p, axis=-1, keepdims=True), approx=True)

    ctx = lax.dot_general(
        p.astype(jnp.bfloat16), v,
        (((2,), (1,)), ((0,), (0,))),
        preferred_element_type=jnp.float32)          # [B,S,H]

    attn = _mmw(ctx, wo) + bo
    h1 = _ln(x + attn, ln1g, ln1b)

    ff = _gelu(_mmw(h1, w1) + b1)
    ff = _mmw(ff, w2) + b2
    return _ln(h1 + ff, ln2g, ln2b)


# ---------------- the fused Pallas kernel ----------------
def fused_forward_kernel(ids_ref, mask_ref,
                         wemb_ref, pemb_ref, temb_ref,
                         emb_g_ref, emb_b_ref,
                         wqkv_ref, bqkv_ref, wo_ref, bo_ref,
                         ln1g_ref, ln1b_ref,
                         w1_ref, b1_ref, w2_ref, b2_ref,
                         ln2g_ref, ln2b_ref,
                         wp_ref, bp_ref,
                         w1h_ref, b1h_ref, w2h_ref, b2h_ref,
                         w3h_ref, b3h_ref,
                         o_ref):
    ids = ids_ref[...]                                              # [B,S] int32
    B, S = ids.shape

    # in-kernel word-embedding gather as a one-hot MXU matmul against the VMEM table
    onehot = (lax.broadcasted_iota(jnp.int32, (B, S, VOCAB), 2)
              == ids[:, :, None]).astype(jnp.float32)               # [B,S,VOCAB]
    emb = lax.dot_general(
        onehot, wemb_ref[...],
        (((2,), (0,)), ((), ())),
        preferred_element_type=jnp.float32)                         # [B,S,H]
    emb = emb + pemb_ref[...] + temb_ref[...]                       # +pos +type0

    # embedding LayerNorm
    x = _ln(emb, emb_g_ref[...], emb_b_ref[...])                    # [B,S,H] f32

    # additive attention-mask bias, built in-kernel from the raw int mask
    mask_bias = (1.0 - mask_ref[...].astype(jnp.float32)) * -10000.0   # [B,S]
    mask_bias = mask_bias[:, None, :]                                   # [B,1,S]

    # encoder layers (static unroll over stacked layer weights)
    for l in range(N_LAYERS):
        x = _encoder_layer(
            x, mask_bias,
            wqkv_ref[l], bqkv_ref[l], wo_ref[l], bo_ref[l],
            ln1g_ref[l], ln1b_ref[l],
            w1_ref[l], b1_ref[l], w2_ref[l], b2_ref[l],
            ln2g_ref[l], ln2b_ref[l])

    # BERT pooler: tanh(Linear(cls_token))
    cls = x[:, 0, :]                                                 # [B,H]
    pooled = jnp.tanh(_mmw(cls, wp_ref[...]) + bp_ref[...])

    # classification head: Linear->ReLU->(Dropout=identity)->Linear->ReLU->(Dropout)->Linear
    # TODO(synk): nn.Dropout(0.1) training-mode stochasticity not implemented; eval identity.
    h = jnp.maximum(_mmw(pooled, w1h_ref[...]) + b1h_ref[...], 0.0)
    h = jnp.maximum(_mmw(h, w2h_ref[...]) + b2h_ref[...], 0.0)
    # lane-dense padded logits store (cols >= N_CLASSES have zero weights/bias)
    o_ref[...] = _mmw(h, w3h_ref[...]) + b3h_ref[...]


# ---------------- pallas_call wrapper ----------------
def fused_forward(input_ids, attention_mask, p):
    B = input_ids.shape[0]
    args = [input_ids, attention_mask,
            p["word_emb"], p["pos_emb"], p["type_emb0"],
            p["emb_ln_g"], p["emb_ln_b"],
            p["wqkv"], p["bqkv"], p["wo"], p["bo"],
            p["ln1_g"], p["ln1_b"],
            p["w1"], p["b1"], p["w2"], p["b2"],
            p["ln2_g"], p["ln2_b"],
            p["wp"], p["bp"],
            p["w1h"], p["b1h"], p["w2h"], p["b2h"],
            p["w3h_pad"], p["b3h_pad"]]
    # Gridless call: single invocation, full arrays VMEM-resident, single-buffered
    # (no 2x VMEM for 27 inputs that would never be pipelined anyway).
    return pl.pallas_call(
        fused_forward_kernel,
        in_specs=[pl.BlockSpec(memory_space=pltpu.MemorySpace.VMEM) for _ in args],
        out_specs=pl.BlockSpec(memory_space=pltpu.MemorySpace.VMEM),
        out_shape=jax.ShapeDtypeStruct((B, LOGIT_PAD), jnp.float32),
    )(*args)


# ---------------- deterministic parameter init ----------------
def init_params(key):
    def nrm(k, shape, std=0.02):
        return std * jax.random.normal(k, shape, jnp.float32)

    def kaiming(k, fan_in, fan_out):
        std = math.sqrt(2.0 / fan_in)
        return std * jax.random.normal(k, (fan_in, fan_out), jnp.float32)

    keys = iter(jax.random.split(key, 32))

    p = {
        # embeddings (kept f32: one-hot gather matmul is exact row selection)
        "word_emb": nrm(next(keys), (VOCAB, HIDDEN)),
        "pos_emb": nrm(next(keys), (SEQ, HIDDEN)),
        "type_emb0": nrm(next(keys), (1, HIDDEN)),      # token_type_ids == 0 everywhere
        "emb_ln_g": jnp.ones((1, HIDDEN), jnp.float32),
        "emb_ln_b": jnp.zeros((1, HIDDEN), jnp.float32),
        # pooler
        "wp": nrm(next(keys), (HIDDEN, HIDDEN)).astype(jnp.bfloat16),
        "bp": jnp.zeros((1, HIDDEN), jnp.float32),
        # classification head: kaiming_normal_(fan_in, relu), zero bias
        "w1h": kaiming(next(keys), HIDDEN, HEAD1).astype(jnp.bfloat16),
        "b1h": jnp.zeros((1, HEAD1), jnp.float32),
        "w2h": kaiming(next(keys), HEAD1, HEAD2).astype(jnp.bfloat16),
        "b2h": jnp.zeros((1, HEAD2), jnp.float32),
    }
    w3 = kaiming(next(keys), HEAD2, N_CLASSES)
    w3_pad = jnp.zeros((HEAD2, LOGIT_PAD), jnp.float32).at[:, :N_CLASSES].set(w3)
    p["w3h_pad"] = w3_pad.astype(jnp.bfloat16)
    p["b3h_pad"] = jnp.zeros((1, LOGIT_PAD), jnp.float32)

    # stacked encoder-layer weights: fused QKV + output proj + FFN + LayerNorms
    wqkv, wo, w1, w2 = [], [], [], []
    for _ in range(N_LAYERS):
        wq = nrm(next(keys), (HIDDEN, HIDDEN))
        wk = nrm(next(keys), (HIDDEN, HIDDEN))
        wv = nrm(next(keys), (HIDDEN, HIDDEN))
        wqkv.append(jnp.concatenate([wq, wk, wv], axis=1))           # [H, 3H]
        wo.append(nrm(next(keys), (HIDDEN, HIDDEN)))
        w1.append(nrm(next(keys), (HIDDEN, FFN)))
        w2.append(nrm(next(keys), (FFN, HIDDEN)))

    p["wqkv"] = jnp.stack(wqkv).astype(jnp.bfloat16)                 # [L, H, 3H]
    p["bqkv"] = jnp.zeros((N_LAYERS, 1, 3 * HIDDEN), jnp.float32)
    p["wo"] = jnp.stack(wo).astype(jnp.bfloat16)                     # [L, H, H]
    p["bo"] = jnp.zeros((N_LAYERS, 1, HIDDEN), jnp.float32)
    p["ln1_g"] = jnp.ones((N_LAYERS, 1, HIDDEN), jnp.float32)
    p["ln1_b"] = jnp.zeros((N_LAYERS, 1, HIDDEN), jnp.float32)
    p["w1"] = jnp.stack(w1).astype(jnp.bfloat16)                     # [L, H, FFN]
    p["b1"] = jnp.zeros((N_LAYERS, 1, FFN), jnp.float32)
    p["w2"] = jnp.stack(w2).astype(jnp.bfloat16)                     # [L, FFN, H]
    p["b2"] = jnp.zeros((N_LAYERS, 1, HIDDEN), jnp.float32)
    p["ln2_g"] = jnp.ones((N_LAYERS, 1, HIDDEN), jnp.float32)
    p["ln2_b"] = jnp.zeros((N_LAYERS, 1, HIDDEN), jnp.float32)
    return p


# ---------------- forward: everything (incl. embedding gather) is inside the kernel ----------------
def sentiment_classifier_forward(params, input_ids, attention_mask):
    logits_pad = fused_forward(input_ids.astype(jnp.int32),
                               attention_mask.astype(jnp.int32), params)
    return logits_pad[:, :N_CLASSES]


if __name__ == "__main__":
    key = jax.random.PRNGKey(0)
    pkey, idkey = jax.random.split(key)
    params = init_params(pkey)

    input_ids = jax.random.randint(idkey, (2, SEQ), 0, VOCAB, dtype=jnp.int32)
    attention_mask = jnp.array([[1] * SEQ, [1] * (SEQ - 2) + [0] * 2], dtype=jnp.int32)

    logits = sentiment_classifier_forward(params, input_ids, attention_mask)
    jax.block_until_ready(logits)
    assert logits.shape == (2, N_CLASSES) and logits.dtype == jnp.float32
    assert bool(jnp.all(jnp.isfinite(logits)))
    print("KERNEL_OK")
</pallas_src>

<mosaic_0001>
module attributes {stable_mosaic.version = 11 : i64} {
  func.func @fused_forward_kernel(%arg0: memref<2x8xi32, #tpu.memory_space<vmem>>, %arg1: memref<2x8xi32, #tpu.memory_space<vmem>>, %arg2: memref<64x32xf32, #tpu.memory_space<vmem>>, %arg3: memref<8x32xf32, #tpu.memory_space<vmem>>, %arg4: memref<1x32xf32, #tpu.memory_space<vmem>>, %arg5: memref<1x32xf32, #tpu.memory_space<vmem>>, %arg6: memref<1x32xf32, #tpu.memory_space<vmem>>, %arg7: memref<2x32x96xbf16, #tpu.memory_space<vmem>>, %arg8: memref<2x1x96xf32, #tpu.memory_space<vmem>>, %arg9: memref<2x32x32xbf16, #tpu.memory_space<vmem>>, %arg10: memref<2x1x32xf32, #tpu.memory_space<vmem>>, %arg11: memref<2x1x32xf32, #tpu.memory_space<vmem>>, %arg12: memref<2x1x32xf32, #tpu.memory_space<vmem>>, %arg13: memref<2x32x128xbf16, #tpu.memory_space<vmem>>, %arg14: memref<2x1x128xf32, #tpu.memory_space<vmem>>, %arg15: memref<2x128x32xbf16, #tpu.memory_space<vmem>>, %arg16: memref<2x1x32xf32, #tpu.memory_space<vmem>>, %arg17: memref<2x1x32xf32, #tpu.memory_space<vmem>>, %arg18: memref<2x1x32xf32, #tpu.memory_space<vmem>>, %arg19: memref<32x32xbf16, #tpu.memory_space<vmem>>, %arg20: memref<1x32xf32, #tpu.memory_space<vmem>>, %arg21: memref<32x512xbf16, #tpu.memory_space<vmem>>, %arg22: memref<1x512xf32, #tpu.memory_space<vmem>>, %arg23: memref<512x256xbf16, #tpu.memory_space<vmem>>, %arg24: memref<1x256xf32, #tpu.memory_space<vmem>>, %arg25: memref<256x128xbf16, #tpu.memory_space<vmem>>, %arg26: memref<1x128xf32, #tpu.memory_space<vmem>>, %arg27: memref<2x128xf32, #tpu.memory_space<vmem>>) attributes {dimension_semantics = [], scalar_prefetch = 0 : i64, scratch_operands = 0 : i64, tpu.core_type = #tpu.core_type<tc>} {
    %c0 = arith.constant 0 : index
    %c0_0 = arith.constant 0 : index
    %0 = vector.load %arg0[%c0, %c0_0] : memref<2x8xi32, #tpu.memory_space<vmem>>, vector<2x8xi32>
    %1 = tpu.iota {dimensions = array<i32: 2>} : vector<2x8x64xi32>
    %2 = vector.shape_cast %0 : vector<2x8xi32> to vector<2x8x1xi32>
    %3 = vector.broadcast %2 : vector<2x8x1xi32> to vector<2x8x64xi32>
    %4 = arith.cmpi eq, %1, %3 : vector<2x8x64xi32>
    %5 = arith.extui %4 : vector<2x8x64xi1> to vector<2x8x64xi32>
    %6 = arith.sitofp %5 : vector<2x8x64xi32> to vector<2x8x64xf32>
    %c0_1 = arith.constant 0 : index
    %c0_2 = arith.constant 0 : index
    %7 = vector.load %arg2[%c0_1, %c0_2] : memref<64x32xf32, #tpu.memory_space<vmem>>, vector<64x32xf32>
    %cst = arith.constant dense<0.000000e+00> : vector<2x8x32xf32>
    %8 = tpu.matmul %6, %7, %cst {dimension_numbers = #tpu.dot_dimension_numbers<[2], [0], [0, 1], [1], [0, 0, 0, 1, 1, 1], [], []>} : vector<2x8x64xf32>, vector<64x32xf32>, vector<2x8x32xf32> -> vector<2x8x32xf32>
    %c0_3 = arith.constant 0 : index
    %c0_4 = arith.constant 0 : index
    %9 = vector.load %arg3[%c0_3, %c0_4] : memref<8x32xf32, #tpu.memory_space<vmem>>, vector<8x32xf32>
    %10 = vector.shape_cast %9 : vector<8x32xf32> to vector<1x8x32xf32>
    %11 = vector.broadcast %10 : vector<1x8x32xf32> to vector<2x8x32xf32>
    %12 = arith.addf %8, %11 : vector<2x8x32xf32>
    %c0_5 = arith.constant 0 : index
    %c0_6 = arith.constant 0 : index
    %13 = vector.load %arg4[%c0_5, %c0_6] : memref<1x32xf32, #tpu.memory_space<vmem>>, vector<1x32xf32>
    %14 = vector.shape_cast %13 : vector<1x32xf32> to vector<1x1x32xf32>
    %15 = vector.broadcast %14 : vector<1x1x32xf32> to vector<2x8x32xf32>
    %16 = arith.addf %12, %15 : vector<2x8x32xf32>
    %c0_7 = arith.constant 0 : index
    %c0_8 = arith.constant 0 : index
    %17 = vector.load %arg5[%c0_7, %c0_8] : memref<1x32xf32, #tpu.memory_space<vmem>>, vector<1x32xf32>
    %c0_9 = arith.constant 0 : index
    %c0_10 = arith.constant 0 : index
    %18 = vector.load %arg6[%c0_9, %c0_10] : memref<1x32xf32, #tpu.memory_space<vmem>>, vector<1x32xf32>
    %cst_11 = arith.constant dense<0.000000e+00> : vector<2x8xf32>
    %19 = vector.multi_reduction <add>, %16, %cst_11 [2] : vector<2x8x32xf32> to vector<2x8xf32>
    %20 = vector.shape_cast %19 : vector<2x8xf32> to vector<2x8x1xf32>
    %cst_12 = arith.constant 3.200000e+01 : f32
    %21 = vector.broadcast %cst_12 : f32 to vector<2x8x1xf32>
    %22 = arith.divf %20, %21 : vector<2x8x1xf32>
    %23 = arith.mulf %16, %16 : vector<2x8x32xf32>
    %cst_13 = arith.constant dense<0.000000e+00> : vector<2x8xf32>
    %24 = vector.multi_reduction <add>, %23, %cst_13 [2] : vector<2x8x32xf32> to vector<2x8xf32>
    %25 = vector.shape_cast %24 : vector<2x8xf32> to vector<2x8x1xf32>
    %cst_14 = arith.constant 3.200000e+01 : f32
    %26 = vector.broadcast %cst_14 : f32 to vector<2x8x1xf32>
    %27 = arith.divf %25, %26 : vector<2x8x1xf32>
    %28 = arith.mulf %22, %22 : vector<2x8x1xf32>
    %29 = arith.subf %27, %28 : vector<2x8x1xf32>
    %30 = vector.broadcast %22 : vector<2x8x1xf32> to vector<2x8x32xf32>
    %31 = arith.subf %16, %30 : vector<2x8x32xf32>
    %cst_15 = arith.constant 9.99999996E-13 : f32
    %32 = vector.broadcast %cst_15 : f32 to vector<2x8x1xf32>
    %33 = arith.addf %29, %32 : vector<2x8x1xf32>
    %34 = math.rsqrt %33 : vector<2x8x1xf32>
    %35 = vector.broadcast %34 : vector<2x8x1xf32> to vector<2x8x32xf32>
    %36 = arith.mulf %31, %35 : vector<2x8x32xf32>
    %37 = vector.shape_cast %17 : vector<1x32xf32> to vector<1x1x32xf32>
    %38 = vector.broadcast %37 : vector<1x1x32xf32> to vector<2x8x32xf32>
    %39 = arith.mulf %36, %38 : vector<2x8x32xf32>
    %40 = vector.shape_cast %18 : vector<1x32xf32> to vector<1x1x32xf32>
    %41 = vector.broadcast %40 : vector<1x1x32xf32> to vector<2x8x32xf32>
    %42 = arith.addf %39, %41 : vector<2x8x32xf32>
    %c0_16 = arith.constant 0 : index
    %c0_17 = arith.constant 0 : index
    %43 = vector.load %arg1[%c0_16, %c0_17] : memref<2x8xi32, #tpu.memory_space<vmem>>, vector<2x8xi32>
    %44 = arith.sitofp %43 : vector<2x8xi32> to vector<2x8xf32>
    %cst_18 = arith.constant 1.000000e+00 : f32
    %45 = vector.broadcast %cst_18 : f32 to vector<2x8xf32>
    %46 = arith.subf %45, %44 : vector<2x8xf32>
    %cst_19 = arith.constant -1.000000e+04 : f32
    %47 = vector.broadcast %cst_19 : f32 to vector<2x8xf32>
    %48 = arith.mulf %46, %47 : vector<2x8xf32>
    %49 = vector.shape_cast %48 : vector<2x8xf32> to vector<2x1x8xf32>
    %c0_20 = arith.constant 0 : index
    %c0_21 = arith.constant 0 : index
    %c0_22 = arith.constant 0 : index
    %50 = vector.load %arg7[%c0_20, %c0_21, %c0_22] : memref<2x32x96xbf16, #tpu.memory_space<vmem>>, vector<1x32x96xbf16>
    %51 = vector.shape_cast %50 : vector<1x32x96xbf16> to vector<32x96xbf16>
    %c0_23 = arith.constant 0 : index
    %c0_24 = arith.constant 0 : index
    %c0_25 = arith.constant 0 : index
    %52 = vector.load %arg8[%c0_23, %c0_24, %c0_25] : memref<2x1x96xf32, #tpu.memory_space<vmem>>, vector<1x1x96xf32>
    %53 = vector.shape_cast %52 : vector<1x1x96xf32> to vector<1x96xf32>
    %c0_26 = arith.constant 0 : index
    %c0_27 = arith.constant 0 : index
    %c0_28 = arith.constant 0 : index
    %54 = vector.load %arg9[%c0_26, %c0_27, %c0_28] : memref<2x32x32xbf16, #tpu.memory_space<vmem>>, vector<1x32x32xbf16>
    %55 = vector.shape_cast %54 : vector<1x32x32xbf16> to vector<32x32xbf16>
    %c0_29 = arith.constant 0 : index
    %c0_30 = arith.constant 0 : index
    %c0_31 = arith.constant 0 : index
    %56 = vector.load %arg10[%c0_29, %c0_30, %c0_31] : memref<2x1x32xf32, #tpu.memory_space<vmem>>, vector<1x1x32xf32>
    %57 = vector.shape_cast %56 : vector<1x1x32xf32> to vector<1x32xf32>
    %c0_32 = arith.constant 0 : index
    %c0_33 = arith.constant 0 : index
    %c0_34 = arith.constant 0 : index
    %58 = vector.load %arg11[%c0_32, %c0_33, %c0_34] : memref<2x1x32xf32, #tpu.memory_space<vmem>>, vector<1x1x32xf32>
    %59 = vector.shape_cast %58 : vector<1x1x32xf32> to vector<1x32xf32>
    %c0_35 = arith.constant 0 : index
    %c0_36 = arith.constant 0 : index
    %c0_37 = arith.constant 0 : index
    %60 = vector.load %arg12[%c0_35, %c0_36, %c0_37] : memref<2x1x32xf32, #tpu.memory_space<vmem>>, vector<1x1x32xf32>
    %61 = vector.shape_cast %60 : vector<1x1x32xf32> to vector<1x32xf32>
    %c0_38 = arith.constant 0 : index
    %c0_39 = arith.constant 0 : index
    %c0_40 = arith.constant 0 : index
    %62 = vector.load %arg13[%c0_38, %c0_39, %c0_40] : memref<2x32x128xbf16, #tpu.memory_space<vmem>>, vector<1x32x128xbf16>
    %63 = vector.shape_cast %62 : vector<1x32x128xbf16> to vector<32x128xbf16>
    %c0_41 = arith.constant 0 : index
    %c0_42 = arith.constant 0 : index
    %c0_43 = arith.constant 0 : index
    %64 = vector.load %arg14[%c0_41, %c0_42, %c0_43] : memref<2x1x128xf32, #tpu.memory_space<vmem>>, vector<1x1x128xf32>
    %65 = vector.shape_cast %64 : vector<1x1x128xf32> to vector<1x128xf32>
    %c0_44 = arith.constant 0 : index
    %c0_45 = arith.constant 0 : index
    %c0_46 = arith.constant 0 : index
    %66 = vector.load %arg15[%c0_44, %c0_45, %c0_46] : memref<2x128x32xbf16, #tpu.memory_space<vmem>>, vector<1x128x32xbf16>
    %67 = vector.shape_cast %66 : vector<1x128x32xbf16> to vector<128x32xbf16>
    %c0_47 = arith.constant 0 : index
    %c0_48 = arith.constant 0 : index
    %c0_49 = arith.constant 0 : index
    %68 = vector.load %arg16[%c0_47, %c0_48, %c0_49] : memref<2x1x32xf32, #tpu.memory_space<vmem>>, vector<1x1x32xf32>
    %69 = vector.shape_cast %68 : vector<1x1x32xf32> to vector<1x32xf32>
    %c0_50 = arith.constant 0 : index
    %c0_51 = arith.constant 0 : index
    %c0_52 = arith.constant 0 : index
    %70 = vector.load %arg17[%c0_50, %c0_51, %c0_52] : memref<2x1x32xf32, #tpu.memory_space<vmem>>, vector<1x1x32xf32>
    %71 = vector.shape_cast %70 : vector<1x1x32xf32> to vector<1x32xf32>
    %c0_53 = arith.constant 0 : index
    %c0_54 = arith.constant 0 : index
    %c0_55 = arith.constant 0 : index
    %72 = vector.load %arg18[%c0_53, %c0_54, %c0_55] : memref<2x1x32xf32, #tpu.memory_space<vmem>>, vector<1x1x32xf32>
    %73 = vector.shape_cast %72 : vector<1x1x32xf32> to vector<1x32xf32>
    %74 = arith.truncf %42 : vector<2x8x32xf32> to vector<2x8x32xbf16>
    %cst_56 = arith.constant dense<0.000000e+00> : vector<2x8x96xf32>
    %75 = tpu.matmul %74, %51, %cst_56 {dimension_numbers = #tpu.dot_dimension_numbers<[2], [0], [0, 1], [1], [0, 0, 0, 1, 1, 1], [], []>} : vector<2x8x32xbf16>, vector<32x96xbf16>, vector<2x8x96xf32> -> vector<2x8x96xf32>
    %76 = vector.shape_cast %53 : vector<1x96xf32> to vector<1x1x96xf32>
    %77 = vector.broadcast %76 : vector<1x1x96xf32> to vector<2x8x96xf32>
    %78 = arith.addf %75, %77 : vector<2x8x96xf32>
    %79 = arith.truncf %78 : vector<2x8x96xf32> to vector<2x8x96xbf16>
    %80 = vector.extract_strided_slice %79 {offsets = [0, 0, 0], sizes = [2, 8, 32], strides = [1, 1, 1]} : vector<2x8x96xbf16> to vector<2x8x32xbf16>
    %81 = vector.extract_strided_slice %79 {offsets = [0, 0, 32], sizes = [2, 8, 32], strides = [1, 1, 1]} : vector<2x8x96xbf16> to vector<2x8x32xbf16>
    %82 = vector.extract_strided_slice %79 {offsets = [0, 0, 64], sizes = [2, 8, 32], strides = [1, 1, 1]} : vector<2x8x96xbf16> to vector<2x8x32xbf16>
    %cst_57 = arith.constant dense<0.000000e+00> : vector<2x8x8xf32>
    %83 = tpu.matmul %80, %81, %cst_57 {dimension_numbers = #tpu.dot_dimension_numbers<[2], [2], [1], [1], [0, 0, 0, 1, 1, 1], [0], [0]>} : vector<2x8x32xbf16>, vector<2x8x32xbf16>, vector<2x8x8xf32> -> vector<2x8x8xf32>
    %cst_58 = arith.constant 0.176776692 : f32
    %84 = vector.broadcast %cst_58 : f32 to vector<2x8x8xf32>
    %85 = arith.mulf %83, %84 : vector<2x8x8xf32>
    %86 = vector.broadcast %49 : vector<2x1x8xf32> to vector<2x8x8xf32>
    %87 = arith.addf %85, %86 : vector<2x8x8xf32>
    %88 = math.exp %87 : vector<2x8x8xf32>
    %cst_59 = arith.constant dense<0.000000e+00> : vector<2x8xf32>
    %89 = vector.multi_reduction <add>, %88, %cst_59 [2] : vector<2x8x8xf32> to vector<2x8xf32>
    %90 = vector.shape_cast %89 : vector<2x8xf32> to vector<2x8x1xf32>
    %91 = tpu.reciprocal %90 {approx = true} : vector<2x8x1xf32> -> vector<2x8x1xf32>
    %92 = vector.broadcast %91 : vector<2x8x1xf32> to vector<2x8x8xf32>
    %93 = arith.mulf %88, %92 : vector<2x8x8xf32>
    %94 = arith.truncf %93 : vector<2x8x8xf32> to vector<2x8x8xbf16>
    %cst_60 = arith.constant dense<0.000000e+00> : vector<2x8x32xf32>
    %95 = tpu.matmul %94, %82, %cst_60 {dimension_numbers = #tpu.dot_dimension_numbers<[2], [1], [1], [2], [0, 0, 0, 1, 1, 2], [0], [0]>} : vector<2x8x8xbf16>, vector<2x8x32xbf16>, vector<2x8x32xf32> -> vector<2x8x32xf32>
    %96 = arith.truncf %95 : vector<2x8x32xf32> to vector<2x8x32xbf16>
    %cst_61 = arith.constant dense<0.000000e+00> : vector<2x8x32xf32>
    %97 = tpu.matmul %96, %55, %cst_61 {dimension_numbers = #tpu.dot_dimension_numbers<[2], [0], [0, 1], [1], [0, 0, 0, 1, 1, 1], [], []>} : vector<2x8x32xbf16>, vector<32x32xbf16>, vector<2x8x32xf32> -> vector<2x8x32xf32>
    %98 = vector.shape_cast %57 : vector<1x32xf32> to vector<1x1x32xf32>
    %99 = vector.broadcast %98 : vector<1x1x32xf32> to vector<2x8x32xf32>
    %100 = arith.addf %97, %99 : vector<2x8x32xf32>
    %101 = arith.addf %42, %100 : vector<2x8x32xf32>
    %cst_62 = arith.constant dense<0.000000e+00> : vector<2x8xf32>
    %102 = vector.multi_reduction <add>, %101, %cst_62 [2] : vector<2x8x32xf32> to vector<2x8xf32>
    %103 = vector.shape_cast %102 : vector<2x8xf32> to vector<2x8x1xf32>
    %cst_63 = arith.constant 3.200000e+01 : f32
    %104 = vector.broadcast %cst_63 : f32 to vector<2x8x1xf32>
    %105 = arith.divf %103, %104 : vector<2x8x1xf32>
    %106 = arith.mulf %101, %101 : vector<2x8x32xf32>
    %cst_64 = arith.constant dense<0.000000e+00> : vector<2x8xf32>
    %107 = vector.multi_reduction <add>, %106, %cst_64 [2] : vector<2x8x32xf32> to vector<2x8xf32>
    %108 = vector.shape_cast %107 : vector<2x8xf32> to vector<2x8x1xf32>
    %cst_65 = arith.constant 3.200000e+01 : f32
    %109 = vector.broadcast %cst_65 : f32 to vector<2x8x1xf32>
    %110 = arith.divf %108, %109 : vector<2x8x1xf32>
    %111 = arith.mulf %105, %105 : vector<2x8x1xf32>
    %112 = arith.subf %110, %111 : vector<2x8x1xf32>
    %113 = vector.broadcast %105 : vector<2x8x1xf32> to vector<2x8x32xf32>
    %114 = arith.subf %101, %113 : vector<2x8x32xf32>
    %cst_66 = arith.constant 9.99999996E-13 : f32
    %115 = vector.broadcast %cst_66 : f32 to vector<2x8x1xf32>
    %116 = arith.addf %112, %115 : vector<2x8x1xf32>
    %117 = math.rsqrt %116 : vector<2x8x1xf32>
    %118 = vector.broadcast %117 : vector<2x8x1xf32> to vector<2x8x32xf32>
    %119 = arith.mulf %114, %118 : vector<2x8x32xf32>
    %120 = vector.shape_cast %59 : vector<1x32xf32> to vector<1x1x32xf32>
    %121 = vector.broadcast %120 : vector<1x1x32xf32> to vector<2x8x32xf32>
    %122 = arith.mulf %119, %121 : vector<2x8x32xf32>
    %123 = vector.shape_cast %61 : vector<1x32xf32> to vector<1x1x32xf32>
    %124 = vector.broadcast %123 : vector<1x1x32xf32> to vector<2x8x32xf32>
    %125 = arith.addf %122, %124 : vector<2x8x32xf32>
    %126 = arith.truncf %125 : vector<2x8x32xf32> to vector<2x8x32xbf16>
    %cst_67 = arith.constant dense<0.000000e+00> : vector<2x8x128xf32>
    %127 = tpu.matmul %126, %63, %cst_67 {dimension_numbers = #tpu.dot_dimension_numbers<[2], [0], [0, 1], [1], [0, 0, 0, 1, 1, 1], [], []>} : vector<2x8x32xbf16>, vector<32x128xbf16>, vector<2x8x128xf32> -> vector<2x8x128xf32>
    %128 = vector.shape_cast %65 : vector<1x128xf32> to vector<1x1x128xf32>
    %129 = vector.broadcast %128 : vector<1x1x128xf32> to vector<2x8x128xf32>
    %130 = arith.addf %127, %129 : vector<2x8x128xf32>
    %cst_68 = arith.constant 5.000000e-01 : f32
    %131 = vector.broadcast %cst_68 : f32 to vector<2x8x128xf32>
    %132 = arith.mulf %131, %130 : vector<2x8x128xf32>
    %cst_69 = arith.constant 4.471500e-02 : f32
    %133 = vector.broadcast %cst_69 : f32 to vector<2x8x128xf32>
    %134 = arith.mulf %133, %130 : vector<2x8x128xf32>
    %135 = arith.mulf %134, %130 : vector<2x8x128xf32>
    %136 = arith.mulf %135, %130 : vector<2x8x128xf32>
    %137 = arith.addf %130, %136 : vector<2x8x128xf32>
    %cst_70 = arith.constant 0.797884583 : f32
    %138 = vector.broadcast %cst_70 : f32 to vector<2x8x128xf32>
    %139 = arith.mulf %138, %137 : vector<2x8x128xf32>
    %140 = math.tanh %139 : vector<2x8x128xf32>
    %cst_71 = arith.constant 1.000000e+00 : f32
    %141 = vector.broadcast %cst_71 : f32 to vector<2x8x128xf32>
    %142 = arith.addf %141, %140 : vector<2x8x128xf32>
    %143 = arith.mulf %132, %142 : vector<2x8x128xf32>
    %144 = arith.truncf %143 : vector<2x8x128xf32> to vector<2x8x128xbf16>
    %cst_72 = arith.constant dense<0.000000e+00> : vector<2x8x32xf32>
    %145 = tpu.matmul %144, %67, %cst_72 {dimension_numbers = #tpu.dot_dimension_numbers<[2], [0], [0, 1], [1], [0, 0, 0, 1, 1, 1], [], []>} : vector<2x8x128xbf16>, vector<128x32xbf16>, vector<2x8x32xf32> -> vector<2x8x32xf32>
    %146 = vector.shape_cast %69 : vector<1x32xf32> to vector<1x1x32xf32>
    %147 = vector.broadcast %146 : vector<1x1x32xf32> to vector<2x8x32xf32>
    %148 = arith.addf %145, %147 : vector<2x8x32xf32>
    %149 = arith.addf %125, %148 : vector<2x8x32xf32>
    %cst_73 = arith.constant dense<0.000000e+00> : vector<2x8xf32>
    %150 = vector.multi_reduction <add>, %149, %cst_73 [2] : vector<2x8x32xf32> to vector<2x8xf32>
    %151 = vector.shape_cast %150 : vector<2x8xf32> to vector<2x8x1xf32>
    %cst_74 = arith.constant 3.200000e+01 : f32
    %152 = vector.broadcast %cst_74 : f32 to vector<2x8x1xf32>
    %153 = arith.divf %151, %152 : vector<2x8x1xf32>
    %154 = arith.mulf %149, %149 : vector<2x8x32xf32>
    %cst_75 = arith.constant dense<0.000000e+00> : vector<2x8xf32>
    %155 = vector.multi_reduction <add>, %154, %cst_75 [2] : vector<2x8x32xf32> to vector<2x8xf32>
    %156 = vector.shape_cast %155 : vector<2x8xf32> to vector<2x8x1xf32>
    %cst_76 = arith.constant 3.200000e+01 : f32
    %157 = vector.broadcast %cst_76 : f32 to vector<2x8x1xf32>
    %158 = arith.divf %156, %157 : vector<2x8x1xf32>
    %159 = arith.mulf %153, %153 : vector<2x8x1xf32>
    %160 = arith.subf %158, %159 : vector<2x8x1xf32>
    %161 = vector.broadcast %153 : vector<2x8x1xf32> to vector<2x8x32xf32>
    %162 = arith.subf %149, %161 : vector<2x8x32xf32>
    %cst_77 = arith.constant 9.99999996E-13 : f32
    %163 = vector.broadcast %cst_77 : f32 to vector<2x8x1xf32>
    %164 = arith.addf %160, %163 : vector<2x8x1xf32>
    %165 = math.rsqrt %164 : vector<2x8x1xf32>
    %166 = vector.broadcast %165 : vector<2x8x1xf32> to vector<2x8x32xf32>
    %167 = arith.mulf %162, %166 : vector<2x8x32xf32>
    %168 = vector.shape_cast %71 : vector<1x32xf32> to vector<1x1x32xf32>
    %169 = vector.broadcast %168 : vector<1x1x32xf32> to vector<2x8x32xf32>
    %170 = arith.mulf %167, %169 : vector<2x8x32xf32>
    %171 = vector.shape_cast %73 : vector<1x32xf32> to vector<1x1x32xf32>
    %172 = vector.broadcast %171 : vector<1x1x32xf32> to vector<2x8x32xf32>
    %173 = arith.addf %170, %172 : vector<2x8x32xf32>
    %c1 = arith.constant 1 : index
    %c0_78 = arith.constant 0 : index
    %c0_79 = arith.constant 0 : index
    %174 = vector.load %arg7[%c1, %c0_78, %c0_79] : memref<2x32x96xbf16, #tpu.memory_space<vmem>>, vector<1x32x96xbf16>
    %175 = vector.shape_cast %174 : vector<1x32x96xbf16> to vector<32x96xbf16>
    %c1_80 = arith.constant 1 : index
    %c0_81 = arith.constant 0 : index
    %c0_82 = arith.constant 0 : index
    %176 = vector.load %arg8[%c1_80, %c0_81, %c0_82] : memref<2x1x96xf32, #tpu.memory_space<vmem>>, vector<1x1x96xf32>
    %177 = vector.shape_cast %176 : vector<1x1x96xf32> to vector<1x96xf32>
    %c1_83 = arith.constant 1 : index
    %c0_84 = arith.constant 0 : index
    %c0_85 = arith.constant 0 : index
    %178 = vector.load %arg9[%c1_83, %c0_84, %c0_85] : memref<2x32x32xbf16, #tpu.memory_space<vmem>>, vector<1x32x32xbf16>
    %179 = vector.shape_cast %178 : vector<1x32x32xbf16> to vector<32x32xbf16>
    %c1_86 = arith.constant 1 : index
    %c0_87 = arith.constant 0 : index
    %c0_88 = arith.constant 0 : index
    %180 = vector.load %arg10[%c1_86, %c0_87, %c0_88] : memref<2x1x32xf32, #tpu.memory_space<vmem>>, vector<1x1x32xf32>
    %181 = vector.shape_cast %180 : vector<1x1x32xf32> to vector<1x32xf32>
    %c1_89 = arith.constant 1 : index
    %c0_90 = arith.constant 0 : index
    %c0_91 = arith.constant 0 : index
    %182 = vector.load %arg11[%c1_89, %c0_90, %c0_91] : memref<2x1x32xf32, #tpu.memory_space<vmem>>, vector<1x1x32xf32>
    %183 = vector.shape_cast %182 : vector<1x1x32xf32> to vector<1x32xf32>
    %c1_92 = arith.constant 1 : index
    %c0_93 = arith.constant 0 : index
    %c0_94 = arith.constant 0 : index
    %184 = vector.load %arg12[%c1_92, %c0_93, %c0_94] : memref<2x1x32xf32, #tpu.memory_space<vmem>>, vector<1x1x32xf32>
    %185 = vector.shape_cast %184 : vector<1x1x32xf32> to vector<1x32xf32>
    %c1_95 = arith.constant 1 : index
    %c0_96 = arith.constant 0 : index
    %c0_97 = arith.constant 0 : index
    %186 = vector.load %arg13[%c1_95, %c0_96, %c0_97] : memref<2x32x128xbf16, #tpu.memory_space<vmem>>, vector<1x32x128xbf16>
    %187 = vector.shape_cast %186 : vector<1x32x128xbf16> to vector<32x128xbf16>
    %c1_98 = arith.constant 1 : index
    %c0_99 = arith.constant 0 : index
    %c0_100 = arith.constant 0 : index
    %188 = vector.load %arg14[%c1_98, %c0_99, %c0_100] : memref<2x1x128xf32, #tpu.memory_space<vmem>>, vector<1x1x128xf32>
    %189 = vector.shape_cast %188 : vector<1x1x128xf32> to vector<1x128xf32>
    %c1_101 = arith.constant 1 : index
    %c0_102 = arith.constant 0 : index
    %c0_103 = arith.constant 0 : index
    %190 = vector.load %arg15[%c1_101, %c0_102, %c0_103] : memref<2x128x32xbf16, #tpu.memory_space<vmem>>, vector<1x128x32xbf16>
    %191 = vector.shape_cast %190 : vector<1x128x32xbf16> to vector<128x32xbf16>
    %c1_104 = arith.constant 1 : index
    %c0_105 = arith.constant 0 : index
    %c0_106 = arith.constant 0 : index
    %192 = vector.load %arg16[%c1_104, %c0_105, %c0_106] : memref<2x1x32xf32, #tpu.memory_space<vmem>>, vector<1x1x32xf32>
    %193 = vector.shape_cast %192 : vector<1x1x32xf32> to vector<1x32xf32>
    %c1_107 = arith.constant 1 : index
    %c0_108 = arith.constant 0 : index
    %c0_109 = arith.constant 0 : index
    %194 = vector.load %arg17[%c1_107, %c0_108, %c0_109] : memref<2x1x32xf32, #tpu.memory_space<vmem>>, vector<1x1x32xf32>
    %195 = vector.shape_cast %194 : vector<1x1x32xf32> to vector<1x32xf32>
    %c1_110 = arith.constant 1 : index
    %c0_111 = arith.constant 0 : index
    %c0_112 = arith.constant 0 : index
    %196 = vector.load %arg18[%c1_110, %c0_111, %c0_112] : memref<2x1x32xf32, #tpu.memory_space<vmem>>, vector<1x1x32xf32>
    %197 = vector.shape_cast %196 : vector<1x1x32xf32> to vector<1x32xf32>
    %198 = arith.truncf %173 : vector<2x8x32xf32> to vector<2x8x32xbf16>
    %cst_113 = arith.constant dense<0.000000e+00> : vector<2x8x96xf32>
    %199 = tpu.matmul %198, %175, %cst_113 {dimension_numbers = #tpu.dot_dimension_numbers<[2], [0], [0, 1], [1], [0, 0, 0, 1, 1, 1], [], []>} : vector<2x8x32xbf16>, vector<32x96xbf16>, vector<2x8x96xf32> -> vector<2x8x96xf32>
    %200 = vector.shape_cast %177 : vector<1x96xf32> to vector<1x1x96xf32>
    %201 = vector.broadcast %200 : vector<1x1x96xf32> to vector<2x8x96xf32>
    %202 = arith.addf %199, %201 : vector<2x8x96xf32>
    %203 = arith.truncf %202 : vector<2x8x96xf32> to vector<2x8x96xbf16>
    %204 = vector.extract_strided_slice %203 {offsets = [0, 0, 0], sizes = [2, 8, 32], strides = [1, 1, 1]} : vector<2x8x96xbf16> to vector<2x8x32xbf16>
    %205 = vector.extract_strided_slice %203 {offsets = [0, 0, 32], sizes = [2, 8, 32], strides = [1, 1, 1]} : vector<2x8x96xbf16> to vector<2x8x32xbf16>
    %206 = vector.extract_strided_slice %203 {offsets = [0, 0, 64], sizes = [2, 8, 32], strides = [1, 1, 1]} : vector<2x8x96xbf16> to vector<2x8x32xbf16>
    %cst_114 = arith.constant dense<0.000000e+00> : vector<2x8x8xf32>
    %207 = tpu.matmul %204, %205, %cst_114 {dimension_numbers = #tpu.dot_dimension_numbers<[2], [2], [1], [1], [0, 0, 0, 1, 1, 1], [0], [0]>} : vector<2x8x32xbf16>, vector<2x8x32xbf16>, vector<2x8x8xf32> -> vector<2x8x8xf32>
    %cst_115 = arith.constant 0.176776692 : f32
    %208 = vector.broadcast %cst_115 : f32 to vector<2x8x8xf32>
    %209 = arith.mulf %207, %208 : vector<2x8x8xf32>
    %210 = vector.broadcast %49 : vector<2x1x8xf32> to vector<2x8x8xf32>
    %211 = arith.addf %209, %210 : vector<2x8x8xf32>
    %212 = math.exp %211 : vector<2x8x8xf32>
    %cst_116 = arith.constant dense<0.000000e+00> : vector<2x8xf32>
    %213 = vector.multi_reduction <add>, %212, %cst_116 [2] : vector<2x8x8xf32> to vector<2x8xf32>
    %214 = vector.shape_cast %213 : vector<2x8xf32> to vector<2x8x1xf32>
    %215 = tpu.reciprocal %214 {approx = true} : vector<2x8x1xf32> -> vector<2x8x1xf32>
    %216 = vector.broadcast %215 : vector<2x8x1xf32> to vector<2x8x8xf32>
    %217 = arith.mulf %212, %216 : vector<2x8x8xf32>
    %218 = arith.truncf %217 : vector<2x8x8xf32> to vector<2x8x8xbf16>
    %cst_117 = arith.constant dense<0.000000e+00> : vector<2x8x32xf32>
    %219 = tpu.matmul %218, %206, %cst_117 {dimension_numbers = #tpu.dot_dimension_numbers<[2], [1], [1], [2], [0, 0, 0, 1, 1, 2], [0], [0]>} : vector<2x8x8xbf16>, vector<2x8x32xbf16>, vector<2x8x32xf32> -> vector<2x8x32xf32>
    %220 = arith.truncf %219 : vector<2x8x32xf32> to vector<2x8x32xbf16>
    %cst_118 = arith.constant dense<0.000000e+00> : vector<2x8x32xf32>
    %221 = tpu.matmul %220, %179, %cst_118 {dimension_numbers = #tpu.dot_dimension_numbers<[2], [0], [0, 1], [1], [0, 0, 0, 1, 1, 1], [], []>} : vector<2x8x32xbf16>, vector<32x32xbf16>, vector<2x8x32xf32> -> vector<2x8x32xf32>
    %222 = vector.shape_cast %181 : vector<1x32xf32> to vector<1x1x32xf32>
    %223 = vector.broadcast %222 : vector<1x1x32xf32> to vector<2x8x32xf32>
    %224 = arith.addf %221, %223 : vector<2x8x32xf32>
    %225 = arith.addf %173, %224 : vector<2x8x32xf32>
    %cst_119 = arith.constant dense<0.000000e+00> : vector<2x8xf32>
    %226 = vector.multi_reduction <add>, %225, %cst_119 [2] : vector<2x8x32xf32> to vector<2x8xf32>
    %227 = vector.shape_cast %226 : vector<2x8xf32> to vector<2x8x1xf32>
    %cst_120 = arith.constant 3.200000e+01 : f32
    %228 = vector.broadcast %cst_120 : f32 to vector<2x8x1xf32>
    %229 = arith.divf %227, %228 : vector<2x8x1xf32>
    %230 = arith.mulf %225, %225 : vector<2x8x32xf32>
    %cst_121 = arith.constant dense<0.000000e+00> : vector<2x8xf32>
    %231 = vector.multi_reduction <add>, %230, %cst_121 [2] : vector<2x8x32xf32> to vector<2x8xf32>
    %232 = vector.shape_cast %231 : vector<2x8xf32> to vector<2x8x1xf32>
    %cst_122 = arith.constant 3.200000e+01 : f32
    %233 = vector.broadcast %cst_122 : f32 to vector<2x8x1xf32>
    %234 = arith.divf %232, %233 : vector<2x8x1xf32>
    %235 = arith.mulf %229, %229 : vector<2x8x1xf32>
    %236 = arith.subf %234, %235 : vector<2x8x1xf32>
    %237 = vector.broadcast %229 : vector<2x8x1xf32> to vector<2x8x32xf32>
    %238 = arith.subf %225, %237 : vector<2x8x32xf32>
    %cst_123 = arith.constant 9.99999996E-13 : f32
    %239 = vector.broadcast %cst_123 : f32 to vector<2x8x1xf32>
    %240 = arith.addf %236, %239 : vector<2x8x1xf32>
    %241 = math.rsqrt %240 : vector<2x8x1xf32>
    %242 = vector.broadcast %241 : vector<2x8x1xf32> to vector<2x8x32xf32>
    %243 = arith.mulf %238, %242 : vector<2x8x32xf32>
    %244 = vector.shape_cast %183 : vector<1x32xf32> to vector<1x1x32xf32>
    %245 = vector.broadcast %244 : vector<1x1x32xf32> to vector<2x8x32xf32>
    %246 = arith.mulf %243, %245 : vector<2x8x32xf32>
    %247 = vector.shape_cast %185 : vector<1x32xf32> to vector<1x1x32xf32>
    %248 = vector.broadcast %247 : vector<1x1x32xf32> to vector<2x8x32xf32>
    %249 = arith.addf %246, %248 : vector<2x8x32xf32>
    %250 = arith.truncf %249 : vector<2x8x32xf32> to vector<2x8x32xbf16>
    %cst_124 = arith.constant dense<0.000000e+00> : vector<2x8x128xf32>
    %251 = tpu.matmul %250, %187, %cst_124 {dimension_numbers = #tpu.dot_dimension_numbers<[2], [0], [0, 1], [1], [0, 0, 0, 1, 1, 1], [], []>} : vector<2x8x32xbf16>, vector<32x128xbf16>, vector<2x8x128xf32> -> vector<2x8x128xf32>
    %252 = vector.shape_cast %189 : vector<1x128xf32> to vector<1x1x128xf32>
    %253 = vector.broadcast %252 : vector<1x1x128xf32> to vector<2x8x128xf32>
    %254 = arith.addf %251, %253 : vector<2x8x128xf32>
    %cst_125 = arith.constant 5.000000e-01 : f32
    %255 = vector.broadcast %cst_125 : f32 to vector<2x8x128xf32>
    %256 = arith.mulf %255, %254 : vector<2x8x128xf32>
    %cst_126 = arith.constant 4.471500e-02 : f32
    %257 = vector.broadcast %cst_126 : f32 to vector<2x8x128xf32>
    %258 = arith.mulf %257, %254 : vector<2x8x128xf32>
    %259 = arith.mulf %258, %254 : vector<2x8x128xf32>
    %260 = arith.mulf %259, %254 : vector<2x8x128xf32>
    %261 = arith.addf %254, %260 : vector<2x8x128xf32>
    %cst_127 = arith.constant 0.797884583 : f32
    %262 = vector.broadcast %cst_127 : f32 to vector<2x8x128xf32>
    %263 = arith.mulf %262, %261 : vector<2x8x128xf32>
    %264 = math.tanh %263 : vector<2x8x128xf32>
    %cst_128 = arith.constant 1.000000e+00 : f32
    %265 = vector.broadcast %cst_128 : f32 to vector<2x8x128xf32>
    %266 = arith.addf %265, %264 : vector<2x8x128xf32>
    %267 = arith.mulf %256, %266 : vector<2x8x128xf32>
    %268 = arith.truncf %267 : vector<2x8x128xf32> to vector<2x8x128xbf16>
    %cst_129 = arith.constant dense<0.000000e+00> : vector<2x8x32xf32>
    %269 = tpu.matmul %268, %191, %cst_129 {dimension_numbers = #tpu.dot_dimension_numbers<[2], [0], [0, 1], [1], [0, 0, 0, 1, 1, 1], [], []>} : vector<2x8x128xbf16>, vector<128x32xbf16>, vector<2x8x32xf32> -> vector<2x8x32xf32>
    %270 = vector.shape_cast %193 : vector<1x32xf32> to vector<1x1x32xf32>
    %271 = vector.broadcast %270 : vector<1x1x32xf32> to vector<2x8x32xf32>
    %272 = arith.addf %269, %271 : vector<2x8x32xf32>
    %273 = arith.addf %249, %272 : vector<2x8x32xf32>
    %cst_130 = arith.constant dense<0.000000e+00> : vector<2x8xf32>
    %274 = vector.multi_reduction <add>, %273, %cst_130 [2] : vector<2x8x32xf32> to vector<2x8xf32>
    %275 = vector.shape_cast %274 : vector<2x8xf32> to vector<2x8x1xf32>
    %cst_131 = arith.constant 3.200000e+01 : f32
    %276 = vector.broadcast %cst_131 : f32 to vector<2x8x1xf32>
    %277 = arith.divf %275, %276 : vector<2x8x1xf32>
    %278 = arith.mulf %273, %273 : vector<2x8x32xf32>
    %cst_132 = arith.constant dense<0.000000e+00> : vector<2x8xf32>
    %279 = vector.multi_reduction <add>, %278, %cst_132 [2] : vector<2x8x32xf32> to vector<2x8xf32>
    %280 = vector.shape_cast %279 : vector<2x8xf32> to vector<2x8x1xf32>
    %cst_133 = arith.constant 3.200000e+01 : f32
    %281 = vector.broadcast %cst_133 : f32 to vector<2x8x1xf32>
    %282 = arith.divf %280, %281 : vector<2x8x1xf32>
    %283 = arith.mulf %277, %277 : vector<2x8x1xf32>
    %284 = arith.subf %282, %283 : vector<2x8x1xf32>
    %285 = vector.broadcast %277 : vector<2x8x1xf32> to vector<2x8x32xf32>
    %286 = arith.subf %273, %285 : vector<2x8x32xf32>
    %cst_134 = arith.constant 9.99999996E-13 : f32
    %287 = vector.broadcast %cst_134 : f32 to vector<2x8x1xf32>
    %288 = arith.addf %284, %287 : vector<2x8x1xf32>
    %289 = math.rsqrt %288 : vector<2x8x1xf32>
    %290 = vector.broadcast %289 : vector<2x8x1xf32> to vector<2x8x32xf32>
    %291 = arith.mulf %286, %290 : vector<2x8x32xf32>
    %292 = vector.shape_cast %195 : vector<1x32xf32> to vector<1x1x32xf32>
    %293 = vector.broadcast %292 : vector<1x1x32xf32> to vector<2x8x32xf32>
    %294 = arith.mulf %291, %293 : vector<2x8x32xf32>
    %295 = vector.shape_cast %197 : vector<1x32xf32> to vector<1x1x32xf32>
    %296 = vector.broadcast %295 : vector<1x1x32xf32> to vector<2x8x32xf32>
    %297 = arith.addf %294, %296 : vector<2x8x32xf32>
    %298 = vector.extract_strided_slice %297 {offsets = [0, 0, 0], sizes = [2, 1, 32], strides = [1, 1, 1]} : vector<2x8x32xf32> to vector<2x1x32xf32>
    %299 = vector.shape_cast %298 : vector<2x1x32xf32> to vector<2x32xf32>
    %c0_135 = arith.constant 0 : index
    %c0_136 = arith.constant 0 : index
    %300 = vector.load %arg19[%c0_135, %c0_136] : memref<32x32xbf16, #tpu.memory_space<vmem>>, vector<32x32xbf16>
    %301 = arith.truncf %299 : vector<2x32xf32> to vector<2x32xbf16>
    %cst_137 = arith.constant dense<0.000000e+00> : vector<2x32xf32>
    %302 = tpu.matmul %301, %300, %cst_137 {dimension_numbers = #tpu.dot_dimension_numbers<[1], [0], [0], [1], [0, 0, 1, 1], [], []>} : vector<2x32xbf16>, vector<32x32xbf16>, vector<2x32xf32> -> vector<2x32xf32>
    %c0_138 = arith.constant 0 : index
    %c0_139 = arith.constant 0 : index
    %303 = vector.load %arg20[%c0_138, %c0_139] : memref<1x32xf32, #tpu.memory_space<vmem>>, vector<1x32xf32>
    %304 = vector.broadcast %303 : vector<1x32xf32> to vector<2x32xf32>
    %305 = arith.addf %302, %304 : vector<2x32xf32>
    %306 = math.tanh %305 : vector<2x32xf32>
    %c0_140 = arith.constant 0 : index
    %c0_141 = arith.constant 0 : index
    %307 = vector.load %arg21[%c0_140, %c0_141] : memref<32x512xbf16, #tpu.memory_space<vmem>>, vector<32x512xbf16>
    %308 = arith.truncf %306 : vector<2x32xf32> to vector<2x32xbf16>
    %cst_142 = arith.constant dense<0.000000e+00> : vector<2x512xf32>
    %309 = tpu.matmul %308, %307, %cst_142 {dimension_numbers = #tpu.dot_dimension_numbers<[1], [0], [0], [1], [0, 0, 1, 1], [], []>} : vector<2x32xbf16>, vector<32x512xbf16>, vector<2x512xf32> -> vector<2x512xf32>
    %c0_143 = arith.constant 0 : index
    %c0_144 = arith.constant 0 : index
    %310 = vector.load %arg22[%c0_143, %c0_144] : memref<1x512xf32, #tpu.memory_space<vmem>>, vector<1x512xf32>
    %311 = vector.broadcast %310 : vector<1x512xf32> to vector<2x512xf32>
    %312 = arith.addf %309, %311 : vector<2x512xf32>
    %cst_145 = arith.constant 0.000000e+00 : f32
    %313 = vector.broadcast %cst_145 : f32 to vector<2x512xf32>
    %314 = arith.maximumf %312, %313 : vector<2x512xf32>
    %c0_146 = arith.constant 0 : index
    %c0_147 = arith.constant 0 : index
    %315 = vector.load %arg23[%c0_146, %c0_147] : memref<512x256xbf16, #tpu.memory_space<vmem>>, vector<512x256xbf16>
    %316 = arith.truncf %314 : vector<2x512xf32> to vector<2x512xbf16>
    %cst_148 = arith.constant dense<0.000000e+00> : vector<2x256xf32>
    %317 = tpu.matmul %316, %315, %cst_148 {dimension_numbers = #tpu.dot_dimension_numbers<[1], [0], [0], [1], [0, 0, 1, 1], [], []>} : vector<2x512xbf16>, vector<512x256xbf16>, vector<2x256xf32> -> vector<2x256xf32>
    %c0_149 = arith.constant 0 : index
    %c0_150 = arith.constant 0 : index
    %318 = vector.load %arg24[%c0_149, %c0_150] : memref<1x256xf32, #tpu.memory_space<vmem>>, vector<1x256xf32>
    %319 = vector.broadcast %318 : vector<1x256xf32> to vector<2x256xf32>
    %320 = arith.addf %317, %319 : vector<2x256xf32>
    %cst_151 = arith.constant 0.000000e+00 : f32
    %321 = vector.broadcast %cst_151 : f32 to vector<2x256xf32>
    %322 = arith.maximumf %320, %321 : vector<2x256xf32>
    %c0_152 = arith.constant 0 : index
    %c0_153 = arith.constant 0 : index
    %323 = vector.load %arg25[%c0_152, %c0_153] : memref<256x128xbf16, #tpu.memory_space<vmem>>, vector<256x128xbf16>
    %324 = arith.truncf %322 : vector<2x256xf32> to vector<2x256xbf16>
    %cst_154 = arith.constant dense<0.000000e+00> : vector<2x128xf32>
    %325 = tpu.matmul %324, %323, %cst_154 {dimension_numbers = #tpu.dot_dimension_numbers<[1], [0], [0], [1], [0, 0, 1, 1], [], []>} : vector<2x256xbf16>, vector<256x128xbf16>, vector<2x128xf32> -> vector<2x128xf32>
    %c0_155 = arith.constant 0 : index
    %c0_156 = arith.constant 0 : index
    %326 = vector.load %arg26[%c0_155, %c0_156] : memref<1x128xf32, #tpu.memory_space<vmem>>, vector<1x128xf32>
    %327 = vector.broadcast %326 : vector<1x128xf32> to vector<2x128xf32>
    %328 = arith.addf %325, %327 : vector<2x128xf32>
    %c0_157 = arith.constant 0 : index
    %c0_158 = arith.constant 0 : index
    %329 = vector.load %arg27[%c0_157, %c0_158] : memref<2x128xf32, #tpu.memory_space<vmem>>, vector<2x128xf32>
    tpu.vector_store %arg27[%c0_157, %c0_158], %328 {strides = array<i32>} : memref<2x128xf32, #tpu.memory_space<vmem>>, vector<2x128xf32>,
    return
  }
}

</mosaic_0001>

<llo_original>
// kernel: tpu_custom_call.1
$region0: #{tpu_custom_call.1}
  #allocation0 [shape = 'u32[]', space=smem, size = 0x4, offset = 0x4, fixed_abs, tag = 'smem constant byte address 0x4 - core index']
  #allocation1 [shape = 'u32[72,128]{1,0:T(1,128)}', space=vmem, size = 0x9000, scoped, tag = 'internal scratch']
  %s0 = inlined_call_operand.hbm [shape: s32[2,8], index: 0, kind: input, shape index: {}]
  %s1 = inlined_call_operand.hbm [shape: s32[2,8], index: 1, kind: input, shape index: {}]
  %s2 = inlined_call_operand.vmem [shape: f32[64,32], index: 2, kind: input, shape index: {}]
  %s3 = inlined_call_operand.hbm [shape: f32[8,32], index: 3, kind: input, shape index: {}]
  %s4 = inlined_call_operand.hbm [shape: f32[1,32], index: 4, kind: input, shape index: {}]
  %s5 = inlined_call_operand.hbm [shape: f32[1,32], index: 5, kind: input, shape index: {}]
  %s6 = inlined_call_operand.hbm [shape: f32[1,32], index: 6, kind: input, shape index: {}]
  %s7 = inlined_call_operand.vmem [shape: bf16[2,32,96], index: 7, kind: input, shape index: {}]
  %s8 = inlined_call_operand.hbm [shape: f32[2,1,96], index: 8, kind: input, shape index: {}]
  %s9 = inlined_call_operand.hbm [shape: bf16[2,32,32], index: 9, kind: input, shape index: {}]
  %s10 = inlined_call_operand.hbm [shape: f32[2,1,32], index: 10, kind: input, shape index: {}]
  %s11 = inlined_call_operand.hbm [shape: f32[2,1,32], index: 11, kind: input, shape index: {}]
  %s12 = inlined_call_operand.hbm [shape: f32[2,1,32], index: 12, kind: input, shape index: {}]
  %s13 = inlined_call_operand.hbm [shape: bf16[2,32,128], index: 13, kind: input, shape index: {}]
  %s14 = inlined_call_operand.hbm [shape: f32[2,1,128], index: 14, kind: input, shape index: {}]
  %s15 = inlined_call_operand.vmem [shape: bf16[2,128,32], index: 15, kind: input, shape index: {}]
  %s16 = inlined_call_operand.hbm [shape: f32[2,1,32], index: 16, kind: input, shape index: {}]
  %s17 = inlined_call_operand.hbm [shape: f32[2,1,32], index: 17, kind: input, shape index: {}]
  %s18 = inlined_call_operand.hbm [shape: f32[2,1,32], index: 18, kind: input, shape index: {}]
  %s19 = inlined_call_operand.vmem [shape: bf16[32,32], index: 19, kind: input, shape index: {}]
  %s20 = inlined_call_operand.hbm [shape: f32[1,32], index: 20, kind: input, shape index: {}]
  %s21 = inlined_call_operand.vmem [shape: bf16[32,512], index: 21, kind: input, shape index: {}]
  %s22 = inlined_call_operand.vmem [shape: f32[1,512], index: 22, kind: input, shape index: {}]
  %s23 = inlined_call_operand.hbm [shape: bf16[512,256], index: 23, kind: input, shape index: {}]
  %s24 = inlined_call_operand.vmem [shape: f32[1,256], index: 24, kind: input, shape index: {}]
  %s25 = inlined_call_operand.vmem [shape: bf16[256,128], index: 25, kind: input, shape index: {}]
  %s26 = inlined_call_operand.vmem [shape: f32[1,128], index: 26, kind: input, shape index: {}]
  %s27 = inlined_call_operand.hbm [shape: f32[2,128], index: 27, kind: output, shape index: {}]
  %s28 = sld [smem:[#allocation0]]
  $region190: #{tpu_custom_call.1} parent=0
    _
  %s30 = ssub.s32 1, %s28
  %s31 = scalar_select 0, %s30, %s28
  $region1: #{tpu_custom_call.1} parent=0
    #allocation2 [shape = 'u8[1024]{0}', space=vmem, size = 0x400, scoped, tag = 'input window, operand 0, single buffered']
    #allocation3 [shape = 's32[1]{0}', space=sflag, size = 0x4, scoped, tag = 'scoped memory for tpu_custom_call.1']
    #allocation4 [shape = 's32[1]{0}', space=sflag, size = 0x4, scoped, tag = 'scoped memory for tpu_custom_call.1']
    #allocation5 [shape = 'u8[1024]{0}', space=vmem, size = 0x400, scoped, tag = 'input window, operand 1, single buffered']
    #allocation6 [shape = 's32[1]{0}', space=sflag, size = 0x4, scoped, tag = 'scoped memory for tpu_custom_call.1']
    #allocation7 [shape = 'u8[4096]{0}', space=vmem, size = 0x1000, scoped, tag = 'input window, operand 3, single buffered']
    #allocation8 [shape = 'u8[512]{0}', space=vmem, size = 0x400, scoped, tag = 'input window, operand 4, single buffered']
    #allocation9 [shape = 's32[1]{0}', space=sflag, size = 0x4, scoped, tag = 'scoped memory for tpu_custom_call.1']
    #allocation10 [shape = 'u8[512]{0}', space=vmem, size = 0x400, scoped, tag = 'input window, operand 5, single buffered']
    #allocation11 [shape = 'u8[512]{0}', space=vmem, size = 0x400, scoped, tag = 'input window, operand 6, single buffered']
    #allocation12 [shape = 's32[1]{0}', space=sflag, size = 0x4, scoped, tag = 'scoped memory for tpu_custom_call.1']
    #allocation13 [shape = 'u8[1024]{0}', space=vmem, size = 0x400, scoped, tag = 'input window, operand 8, single buffered']
    #allocation14 [shape = 'u8[16384]{0}', space=vmem, size = 0x4000, scoped, tag = 'input window, operand 9, single buffered']
    #allocation15 [shape = 's32[1]{0}', space=sflag, size = 0x4, scoped, tag = 'scoped memory for tpu_custom_call.1']
    #allocation16 [shape = 'u8[1024]{0}', space=vmem, size = 0x400, scoped, tag = 'input window, operand 10, single buffered']
    #allocation17 [shape = 'u8[1024]{0}', space=vmem, size = 0x400, scoped, tag = 'input window, operand 11, single buffered']
    #allocation18 [shape = 's32[1]{0}', space=sflag, size = 0x4, scoped, tag = 'scoped memory for tpu_custom_call.1']
    #allocation19 [shape = 'u8[1024]{0}', space=vmem, size = 0x400, scoped, tag = 'input window, operand 12, single buffered']
    #allocation20 [shape = 'u8[16384]{0}', space=vmem, size = 0x4000, scoped, tag = 'input window, operand 13, single buffered']
    #allocation21 [shape = 's32[1]{0}', space=sflag, size = 0x4, scoped, tag = 'scoped memory for tpu_custom_call.1']
    #allocation22 [shape = 'u8[1024]{0}', space=vmem, size = 0x400, scoped, tag = 'input window, operand 14, single buffered']
    #allocation23 [shape = 'u8[1024]{0}', space=vmem, size = 0x400, scoped, tag = 'input window, operand 16, single buffered']
    #allocation24 [shape = 's32[1]{0}', space=sflag, size = 0x4, scoped, tag = 'scoped memory for tpu_custom_call.1']
    #allocation25 [shape = 'u8[1024]{0}', space=vmem, size = 0x400, scoped, tag = 'input window, operand 17, single buffered']
    #allocation26 [shape = 'u8[1024]{0}', space=vmem, size = 0x400, scoped, tag = 'input window, operand 18, single buffered']
    #allocation27 [shape = 's32[1]{0}', space=sflag, size = 0x4, scoped, tag = 'scoped memory for tpu_custom_call.1']
    #allocation28 [shape = 'u8[512]{0}', space=vmem, size = 0x400, scoped, tag = 'input window, operand 20, single buffered']
    #allocation29 [shape = 'u8[262144]{0}', space=vmem, size = 0x40000, scoped, tag = 'input window, operand 23, single buffered']
    #allocation30 [shape = 's32[1]{0}', space=sflag, size = 0x4, scoped, tag = 'scoped memory for tpu_custom_call.1']
    #allocation31 [shape = 'u8[1024]{0}', space=vmem, size = 0x400, scoped, tag = 'output window, operand 0, single buffered']
    %32 = vsyncpa [#allocation3], 0
    %33 = vsyncpa [#allocation6], 0
    %34 = vsyncpa [#allocation9], 0
    %35 = vsyncpa [#allocation12], 0
    %36 = vsyncpa [#allocation15], 0
    %37 = vsyncpa [#allocation18], 0
    %38 = vsyncpa [#allocation21], 0
    %39 = vsyncpa [#allocation24], 0
    %40 = vsyncpa [#allocation27], 0
    %41 = vsyncpa [#allocation30], 0
    %42 = vsyncpa [#allocation4], 0
    // Predicated region
    $region2: #{tpu_custom_call.1} parent=1 // pred_check
      _
    $region3: #{tpu_custom_call.1} parent=1 // pred_check_branch
      %44 = sbr.rel (0) target = $region5
    $region4: #{tpu_custom_call.1} parent=1 // pred_region
      %46 = vsyncadd [#allocation3], 0
      %s48 = sshll.u32 %s0, 4
      %s49 = int_to_ptr.hbm [resolvable:$true] %s48
      %s50 = sshll.u32 [#allocation2], 4
      %s51 = int_to_ptr.vmem [resolvable:$true] %s50
      %53 = dma.hbm_to_vmem [thread:$0]  %s49, 32, %s51, [#allocation3]
    $region5: #{tpu_custom_call.1} parent=1 // pred_fallthru
      _
    // Predicated region
    $region6: #{tpu_custom_call.1} parent=1 // pred_check
      _
    $region7: #{tpu_custom_call.1} parent=1 // pred_check_branch
      %55 = sbr.rel (0) target = $region9
    $region8: #{tpu_custom_call.1} parent=1 // pred_region
      %57 = vsyncadd [#allocation6], 0
      %s59 = sshll.u32 %s1, 4
      %s60 = int_to_ptr.hbm [resolvable:$true] %s59
      %s61 = sshll.u32 [#allocation5], 4
      %s62 = int_to_ptr.vmem [resolvable:$true] %s61
      %64 = dma.hbm_to_vmem [thread:$0]  %s60, 32, %s62, [#allocation6]
    $region9: #{tpu_custom_call.1} parent=1 // pred_fallthru
      _
    // Predicated region
    $region10: #{tpu_custom_call.1} parent=1 // pred_check
      _
    $region11: #{tpu_custom_call.1} parent=1 // pred_check_branch
      %66 = sbr.rel (0) target = $region13
    $region12: #{tpu_custom_call.1} parent=1 // pred_region
      _
    $region13: #{tpu_custom_call.1} parent=1 // pred_fallthru
      _
    // Predicated region
    $region14: #{tpu_custom_call.1} parent=1 // pred_check
      _
    $region15: #{tpu_custom_call.1} parent=1 // pred_check_branch
      %68 = sbr.rel (0) target = $region17
    $region16: #{tpu_custom_call.1} parent=1 // pred_region
      %70 = vsyncadd [#allocation6], 0
      %s72 = sshll.u32 %s3, 4
      %s73 = int_to_ptr.hbm [resolvable:$true] %s72
      %s74 = sshll.u32 [#allocation7], 4
      %s75 = int_to_ptr.vmem [resolvable:$true] %s74
      %77 = dma.hbm_to_vmem [thread:$0]  %s73, 128, %s75, [#allocation6]
    $region17: #{tpu_custom_call.1} parent=1 // pred_fallthru
      _
    // Predicated region
    $region18: #{tpu_custom_call.1} parent=1 // pred_check
      _
    $region19: #{tpu_custom_call.1} parent=1 // pred_check_branch
      %79 = sbr.rel (0) target = $region21
    $region20: #{tpu_custom_call.1} parent=1 // pred_region
      %81 = vsyncadd [#allocation9], 0
      %s83 = sshll.u32 %s4, 4
      %s84 = int_to_ptr.hbm [resolvable:$true] %s83
      %s85 = sshll.u32 [#allocation8], 4
      %s86 = int_to_ptr.vmem [resolvable:$true] %s85
      %88 = dma.hbm_to_vmem [thread:$0]  %s84, 16, %s86, [#allocation9]
    $region21: #{tpu_custom_call.1} parent=1 // pred_fallthru
      _
    // Predicated region
    $region22: #{tpu_custom_call.1} parent=1 // pred_check
      _
    $region23: #{tpu_custom_call.1} parent=1 // pred_check_branch
      %90 = sbr.rel (0) target = $region25
    $region24: #{tpu_custom_call.1} parent=1 // pred_region
      %92 = vsyncadd [#allocation9], 0
      %s94 = sshll.u32 %s5, 4
      %s95 = int_to_ptr.hbm [resolvable:$true] %s94
      %s96 = sshll.u32 [#allocation10], 4
      %s97 = int_to_ptr.vmem [resolvable:$true] %s96
      %99 = dma.hbm_to_vmem [thread:$0]  %s95, 16, %s97, [#allocation9]
    $region25: #{tpu_custom_call.1} parent=1 // pred_fallthru
      _
    // Predicated region
    $region26: #{tpu_custom_call.1} parent=1 // pred_check
      _
    $region27: #{tpu_custom_call.1} parent=1 // pred_check_branch
      %101 = sbr.rel (0) target = $region29
    $region28: #{tpu_custom_call.1} parent=1 // pred_region
      %103 = vsyncadd [#allocation12], 0
      %s105 = sshll.u32 %s6, 4
      %s106 = int_to_ptr.hbm [resolvable:$true] %s105
      %s107 = sshll.u32 [#allocation11], 4
      %s108 = int_to_ptr.vmem [resolvable:$true] %s107
      %110 = dma.hbm_to_vmem [thread:$0]  %s106, 16, %s108, [#allocation12]
    $region29: #{tpu_custom_call.1} parent=1 // pred_fallthru
      _
    // Predicated region
    $region30: #{tpu_custom_call.1} parent=1 // pred_check
      _
    $region31: #{tpu_custom_call.1} parent=1 // pred_check_branch
      %112 = sbr.rel (0) target = $region33
    $region32: #{tpu_custom_call.1} parent=1 // pred_region
      _
    $region33: #{tpu_custom_call.1} parent=1 // pred_fallthru
      _
    // Predicated region
    $region34: #{tpu_custom_call.1} parent=1 // pred_check
      _
    $region35: #{tpu_custom_call.1} parent=1 // pred_check_branch
      %114 = sbr.rel (0) target = $region37
    $region36: #{tpu_custom_call.1} parent=1 // pred_region
      %116 = vsyncadd [#allocation12], 0
      %s117 = sshll.u32 %s8, 4
      %s118 = int_to_ptr.hbm [resolvable:$true] %s117
      %s119 = sshll.u32 [#allocation13], 4
      %s120 = int_to_ptr.vmem [resolvable:$true] %s119
      %125 = dma.hbm_to_vmem [thread:$0]  %s118, 32, %s120, [#allocation12], 16, 16, 1
    $region37: #{tpu_custom_call.1} parent=1 // pred_fallthru
      _
    // Predicated region
    $region38: #{tpu_custom_call.1} parent=1 // pred_check
      _
    $region39: #{tpu_custom_call.1} parent=1 // pred_check_branch
      %127 = sbr.rel (0) target = $region41
    $region40: #{tpu_custom_call.1} parent=1 // pred_region
      %129 = vsyncadd [#allocation15], 0
      %s130 = sshll.u32 %s9, 4
      %s131 = int_to_ptr.hbm [resolvable:$true] %s130
      %s132 = sshll.u32 [#allocation14], 4
      %s133 = int_to_ptr.vmem [resolvable:$true] %s132
      %138 = dma.hbm_to_vmem [thread:$0]  %s131, 512, %s133, [#allocation15], 64, 64, 4
    $region41: #{tpu_custom_call.1} parent=1 // pred_fallthru
      _
    // Predicated region
    $region42: #{tpu_custom_call.1} parent=1 // pred_check
      _
    $region43: #{tpu_custom_call.1} parent=1 // pred_check_branch
      %140 = sbr.rel (0) target = $region45
    $region44: #{tpu_custom_call.1} parent=1 // pred_region
      %142 = vsyncadd [#allocation15], 0
      %s143 = sshll.u32 %s10, 4
      %s144 = int_to_ptr.hbm [resolvable:$true] %s143
      %s145 = sshll.u32 [#allocation16], 4
      %s146 = int_to_ptr.vmem [resolvable:$true] %s145
      %151 = dma.hbm_to_vmem [thread:$0]  %s144, 32, %s146, [#allocation15], 16, 16, 1
    $region45: #{tpu_custom_call.1} parent=1 // pred_fallthru
      _
    // Predicated region
    $region46: #{tpu_custom_call.1} parent=1 // pred_check
      _
    $region47: #{tpu_custom_call.1} parent=1 // pred_check_branch
      %153 = sbr.rel (0) target = $region49
    $region48: #{tpu_custom_call.1} parent=1 // pred_region
      %155 = vsyncadd [#allocation18], 0
      %s156 = sshll.u32 %s11, 4
      %s157 = int_to_ptr.hbm [resolvable:$true] %s156
      %s158 = sshll.u32 [#allocation17], 4
      %s159 = int_to_ptr.vmem [resolvable:$true] %s158
      %164 = dma.hbm_to_vmem [thread:$0]  %s157, 32, %s159, [#allocation18], 16, 16, 1
    $region49: #{tpu_custom_call.1} parent=1 // pred_fallthru
      _
    // Predicated region
    $region50: #{tpu_custom_call.1} parent=1 // pred_check
      _
    $region51: #{tpu_custom_call.1} parent=1 // pred_check_branch
      %166 = sbr.rel (0) target = $region53
    $region52: #{tpu_custom_call.1} parent=1 // pred_region
      %168 = vsyncadd [#allocation18], 0
      %s169 = sshll.u32 %s12, 4
      %s170 = int_to_ptr.hbm [resolvable:$true] %s169
      %s171 = sshll.u32 [#allocation19], 4
      %s172 = int_to_ptr.vmem [resolvable:$true] %s171
      %177 = dma.hbm_to_vmem [thread:$0]  %s170, 32, %s172, [#allocation18], 16, 16, 1
    $region53: #{tpu_custom_call.1} parent=1 // pred_fallthru
      _
    // Predicated region
    $region54: #{tpu_custom_call.1} parent=1 // pred_check
      _
    $region55: #{tpu_custom_call.1} parent=1 // pred_check_branch
      %179 = sbr.rel (0) target = $region57
    $region56: #{tpu_custom_call.1} parent=1 // pred_region
      %181 = vsyncadd [#allocation21], 0
      %s182 = sshll.u32 %s13, 4
      %s183 = int_to_ptr.hbm [resolvable:$true] %s182
      %s184 = sshll.u32 [#allocation20], 4
      %s185 = int_to_ptr.vmem [resolvable:$true] %s184
      %190 = dma.hbm_to_vmem [thread:$0]  %s183, 512, %s185, [#allocation21], 64, 64, 4
    $region57: #{tpu_custom_call.1} parent=1 // pred_fallthru
      _
    // Predicated region
    $region58: #{tpu_custom_call.1} parent=1 // pred_check
      _
    $region59: #{tpu_custom_call.1} parent=1 // pred_check_branch
      %192 = sbr.rel (0) target = $region61
    $region60: #{tpu_custom_call.1} parent=1 // pred_region
      %194 = vsyncadd [#allocation21], 0
      %s195 = sshll.u32 %s14, 4
      %s196 = int_to_ptr.hbm [resolvable:$true] %s195
      %s197 = sshll.u32 [#allocation22], 4
      %s198 = int_to_ptr.vmem [resolvable:$true] %s197
      %203 = dma.hbm_to_vmem [thread:$0]  %s196, 32, %s198, [#allocation21], 16, 16, 1
    $region61: #{tpu_custom_call.1} parent=1 // pred_fallthru
      _
    // Predicated region
    $region62: #{tpu_custom_call.1} parent=1 // pred_check
      _
    $region63: #{tpu_custom_call.1} parent=1 // pred_check_branch
      %205 = sbr.rel (0) target = $region65
    $region64: #{tpu_custom_call.1} parent=1 // pred_region
      _
    $region65: #{tpu_custom_call.1} parent=1 // pred_fallthru
      _
    // Predicated region
    $region66: #{tpu_custom_call.1} parent=1 // pred_check
      _
    $region67: #{tpu_custom_call.1} parent=1 // pred_check_branch
      %207 = sbr.rel (0) target = $region69
    $region68: #{tpu_custom_call.1} parent=1 // pred_region
      %209 = vsyncadd [#allocation24], 0
      %s210 = sshll.u32 %s16, 4
      %s211 = int_to_ptr.hbm [resolvable:$true] %s210
      %s212 = sshll.u32 [#allocation23], 4
      %s213 = int_to_ptr.vmem [resolvable:$true] %s212
      %218 = dma.hbm_to_vmem [thread:$0]  %s211, 32, %s213, [#allocation24], 16, 16, 1
    $region69: #{tpu_custom_call.1} parent=1 // pred_fallthru
      _
    // Predicated region
    $region70: #{tpu_custom_call.1} parent=1 // pred_check
      _
    $region71: #{tpu_custom_call.1} parent=1 // pred_check_branch
      %220 = sbr.rel (0) target = $region73
    $region72: #{tpu_custom_call.1} parent=1 // pred_region
      %222 = vsyncadd [#allocation24], 0
      %s223 = sshll.u32 %s17, 4
      %s224 = int_to_ptr.hbm [resolvable:$true] %s223
      %s225 = sshll.u32 [#allocation25], 4
      %s226 = int_to_ptr.vmem [resolvable:$true] %s225
      %231 = dma.hbm_to_vmem [thread:$0]  %s224, 32, %s226, [#allocation24], 16, 16, 1
    $region73: #{tpu_custom_call.1} parent=1 // pred_fallthru
      _
    // Predicated region
    $region74: #{tpu_custom_call.1} parent=1 // pred_check
      _
    $region75: #{tpu_custom_call.1} parent=1 // pred_check_branch
      %233 = sbr.rel (0) target = $region77
    $region76: #{tpu_custom_call.1} parent=1 // pred_region
      %235 = vsyncadd [#allocation27], 0
      %s236 = sshll.u32 %s18, 4
      %s237 = int_to_ptr.hbm [resolvable:$true] %s236
      %s238 = sshll.u32 [#allocation26], 4
      %s239 = int_to_ptr.vmem [resolvable:$true] %s238
      %244 = dma.hbm_to_vmem [thread:$0]  %s237, 32, %s239, [#allocation27], 16, 16, 1
    $region77: #{tpu_custom_call.1} parent=1 // pred_fallthru
      _
    // Predicated region
    $region78: #{tpu_custom_call.1} parent=1 // pred_check
      _
    $region79: #{tpu_custom_call.1} parent=1 // pred_check_branch
      %246 = sbr.rel (0) target = $region81
    $region80: #{tpu_custom_call.1} parent=1 // pred_region
      _
    $region81: #{tpu_custom_call.1} parent=1 // pred_fallthru
      _
    // Predicated region
    $region82: #{tpu_custom_call.1} parent=1 // pred_check
      _
    $region83: #{tpu_custom_call.1} parent=1 // pred_check_branch
      %248 = sbr.rel (0) target = $region85
    $region84: #{tpu_custom_call.1} parent=1 // pred_region
      %250 = vsyncadd [#allocation27], 0
      %s252 = sshll.u32 %s20, 4
      %s253 = int_to_ptr.hbm [resolvable:$true] %s252
      %s254 = sshll.u32 [#allocation28], 4
      %s255 = int_to_ptr.vmem [resolvable:$true] %s254
      %257 = dma.hbm_to_vmem [thread:$0]  %s253, 16, %s255, [#allocation27]
    $region85: #{tpu_custom_call.1} parent=1 // pred_fallthru
      _
    // Predicated region
    $region86: #{tpu_custom_call.1} parent=1 // pred_check
      _
    $region87: #{tpu_custom_call.1} parent=1 // pred_check_branch
      %259 = sbr.rel (0) target = $region89
    $region88: #{tpu_custom_call.1} parent=1 // pred_region
      _
    $region89: #{tpu_custom_call.1} parent=1 // pred_fallthru
      _
    // Predicated region
    $region90: #{tpu_custom_call.1} parent=1 // pred_check
      _
    $region91: #{tpu_custom_call.1} parent=1 // pred_check_branch
      %261 = sbr.rel (0) target = $region93
    $region92: #{tpu_custom_call.1} parent=1 // pred_region
      _
    $region93: #{tpu_custom_call.1} parent=1 // pred_fallthru
      _
    // Predicated region
    $region94: #{tpu_custom_call.1} parent=1 // pred_check
      _
    $region95: #{tpu_custom_call.1} parent=1 // pred_check_branch
      %263 = sbr.rel (0) target = $region97
    $region96: #{tpu_custom_call.1} parent=1 // pred_region
      %265 = vsyncadd [#allocation30], 0
      %s266 = sshll.u32 %s23, 4
      %s267 = int_to_ptr.hbm [resolvable:$true] %s266
      %s268 = sshll.u32 [#allocation29], 4
      %s269 = int_to_ptr.vmem [resolvable:$true] %s268
      %274 = dma.hbm_to_vmem [thread:$0]  %s267, 8192, %s269, [#allocation30], 128, 128, 8
    $region97: #{tpu_custom_call.1} parent=1 // pred_fallthru
      _
    // Predicated region
    $region98: #{tpu_custom_call.1} parent=1 // pred_check
      _
    $region99: #{tpu_custom_call.1} parent=1 // pred_check_branch
      %276 = sbr.rel (0) target = $region101
    $region100: #{tpu_custom_call.1} parent=1 // pred_region
      _
    $region101: #{tpu_custom_call.1} parent=1 // pred_fallthru
      _
    // Predicated region
    $region102: #{tpu_custom_call.1} parent=1 // pred_check
      _
    $region103: #{tpu_custom_call.1} parent=1 // pred_check_branch
      %278 = sbr.rel (0) target = $region105
    $region104: #{tpu_custom_call.1} parent=1 // pred_region
      _
    $region105: #{tpu_custom_call.1} parent=1 // pred_fallthru
      _
    // Predicated region
    $region106: #{tpu_custom_call.1} parent=1 // pred_check
      _
    $region107: #{tpu_custom_call.1} parent=1 // pred_check_branch
      %280 = sbr.rel (0) target = $region109
    $region108: #{tpu_custom_call.1} parent=1 // pred_region
      _
    $region109: #{tpu_custom_call.1} parent=1 // pred_fallthru
      _
    // Predicated region
    $region110: #{tpu_custom_call.1} parent=1 // pred_check
      _
    $region111: #{tpu_custom_call.1} parent=1 // pred_check_branch
      %282 = sbr.rel (0) target = $region113
    $region112: #{tpu_custom_call.1} parent=1 // pred_region
      %284 = dma.done [#allocation3], 32
    $region113: #{tpu_custom_call.1} parent=1 // pred_fallthru
      _
    // Predicated region
    $region114: #{tpu_custom_call.1} parent=1 // pred_check
      _
    $region115: #{tpu_custom_call.1} parent=1 // pred_check_branch
      %286 = sbr.rel (0) target = $region117
    $region116: #{tpu_custom_call.1} parent=1 // pred_region
      %288 = dma.done [#allocation6], 32
    $region117: #{tpu_custom_call.1} parent=1 // pred_fallthru
      _
    // Predicated region
    $region118: #{tpu_custom_call.1} parent=1 // pred_check
      _
    $region119: #{tpu_custom_call.1} parent=1 // pred_check_branch
      %290 = sbr.rel (0) target = $region121
    $region120: #{tpu_custom_call.1} parent=1 // pred_region
      %292 = dma.done [#allocation6], 128
    $region121: #{tpu_custom_call.1} parent=1 // pred_fallthru
      _
    // Predicated region
    $region122: #{tpu_custom_call.1} parent=1 // pred_check
      _
    $region123: #{tpu_custom_call.1} parent=1 // pred_check_branch
      %294 = sbr.rel (0) target = $region125
    $region124: #{tpu_custom_call.1} parent=1 // pred_region
      %296 = dma.done [#allocation9], 16
    $region125: #{tpu_custom_call.1} parent=1 // pred_fallthru
      _
    // Predicated region
    $region126: #{tpu_custom_call.1} parent=1 // pred_check
      _
    $region127: #{tpu_custom_call.1} parent=1 // pred_check_branch
      %298 = sbr.rel (0) target = $region129
    $region128: #{tpu_custom_call.1} parent=1 // pred_region
      %300 = dma.done [#allocation9], 16
    $region129: #{tpu_custom_call.1} parent=1 // pred_fallthru
      _
    // Predicated region
    $region130: #{tpu_custom_call.1} parent=1 // pred_check
      _
    $region131: #{tpu_custom_call.1} parent=1 // pred_check_branch
      %302 = sbr.rel (0) target = $region133
    $region132: #{tpu_custom_call.1} parent=1 // pred_region
      %304 = dma.done [#allocation12], 16
    $region133: #{tpu_custom_call.1} parent=1 // pred_fallthru
      _
    // Predicated region
    $region134: #{tpu_custom_call.1} parent=1 // pred_check
      _
    $region135: #{tpu_custom_call.1} parent=1 // pred_check_branch
      %306 = sbr.rel (0) target = $region137
    $region136: #{tpu_custom_call.1} parent=1 // pred_region
      %308 = dma.done [#allocation12], 32
    $region137: #{tpu_custom_call.1} parent=1 // pred_fallthru
      _
    // Predicated region
    $region138: #{tpu_custom_call.1} parent=1 // pred_check
      _
    $region139: #{tpu_custom_call.1} parent=1 // pred_check_branch
      %310 = sbr.rel (0) target = $region141
    $region140: #{tpu_custom_call.1} parent=1 // pred_region
      %312 = dma.done [#allocation15], 512
    $region141: #{tpu_custom_call.1} parent=1 // pred_fallthru
      _
    // Predicated region
    $region142: #{tpu_custom_call.1} parent=1 // pred_check
      _
    $region143: #{tpu_custom_call.1} parent=1 // pred_check_branch
      %314 = sbr.rel (0) target = $region145
    $region144: #{tpu_custom_call.1} parent=1 // pred_region
      %316 = dma.done [#allocation15], 32
    $region145: #{tpu_custom_call.1} parent=1 // pred_fallthru
      _
    // Predicated region
    $region146: #{tpu_custom_call.1} parent=1 // pred_check
      _
    $region147: #{tpu_custom_call.1} parent=1 // pred_check_branch
      %318 = sbr.rel (0) target = $region149
    $region148: #{tpu_custom_call.1} parent=1 // pred_region
      %320 = dma.done [#allocation18], 32
    $region149: #{tpu_custom_call.1} parent=1 // pred_fallthru
      _
    // Predicated region
    $region150: #{tpu_custom_call.1} parent=1 // pred_check
      _
    $region151: #{tpu_custom_call.1} parent=1 // pred_check_branch
      %322 = sbr.rel (0) target = $region153
    $region152: #{tpu_custom_call.1} parent=1 // pred_region
      %324 = dma.done [#allocation18], 32
    $region153: #{tpu_custom_call.1} parent=1 // pred_fallthru
      _
    // Predicated region
    $region154: #{tpu_custom_call.1} parent=1 // pred_check
      _
    $region155: #{tpu_custom_call.1} parent=1 // pred_check_branch
      %326 = sbr.rel (0) target = $region157
    $region156: #{tpu_custom_call.1} parent=1 // pred_region
      %328 = dma.done [#allocation21], 512
    $region157: #{tpu_custom_call.1} parent=1 // pred_fallthru
      _
    // Predicated region
    $region158: #{tpu_custom_call.1} parent=1 // pred_check
      _
    $region159: #{tpu_custom_call.1} parent=1 // pred_check_branch
      %330 = sbr.rel (0) target = $region161
    $region160: #{tpu_custom_call.1} parent=1 // pred_region
      %332 = dma.done [#allocation21], 32
    $region161: #{tpu_custom_call.1} parent=1 // pred_fallthru
      _
    // Predicated region
    $region162: #{tpu_custom_call.1} parent=1 // pred_check
      _
    $region163: #{tpu_custom_call.1} parent=1 // pred_check_branch
      %334 = sbr.rel (0) target = $region165
    $region164: #{tpu_custom_call.1} parent=1 // pred_region
      %336 = dma.done [#allocation24], 32
    $region165: #{tpu_custom_call.1} parent=1 // pred_fallthru
      _
    // Predicated region
    $region166: #{tpu_custom_call.1} parent=1 // pred_check
      _
    $region167: #{tpu_custom_call.1} parent=1 // pred_check_branch
      %338 = sbr.rel (0) target = $region169
    $region168: #{tpu_custom_call.1} parent=1 // pred_region
      %340 = dma.done [#allocation24], 32
    $region169: #{tpu_custom_call.1} parent=1 // pred_fallthru
      _
    // Predicated region
    $region170: #{tpu_custom_call.1} parent=1 // pred_check
      _
    $region171: #{tpu_custom_call.1} parent=1 // pred_check_branch
      %342 = sbr.rel (0) target = $region173
    $region172: #{tpu_custom_call.1} parent=1 // pred_region
      %344 = dma.done [#allocation27], 32
    $region173: #{tpu_custom_call.1} parent=1 // pred_fallthru
      _
    // Predicated region
    $region174: #{tpu_custom_call.1} parent=1 // pred_check
      _
    $region175: #{tpu_custom_call.1} parent=1 // pred_check_branch
      %346 = sbr.rel (0) target = $region177
    $region176: #{tpu_custom_call.1} parent=1 // pred_region
      %348 = dma.done [#allocation27], 16
    $region177: #{tpu_custom_call.1} parent=1 // pred_fallthru
      _
    // Predicated region
    $region178: #{tpu_custom_call.1} parent=1 // pred_check
      _
    $region179: #{tpu_custom_call.1} parent=1 // pred_check_branch
      %350 = sbr.rel (0) target = $region181
    $region180: #{tpu_custom_call.1} parent=1 // pred_region
      %352 = dma.done [#allocation30], 8192
    $region181: #{tpu_custom_call.1} parent=1 // pred_fallthru
      _
    %v354 = vld [vmem:[#allocation2] sm:$0x3]
    %v355 = vlaneseq
    %v356 = vand.u32 %v355, 127
    %v357 = vperm.slane %v354, 0
    %v358 = vlaneseq
    %v359 = vshrl.u32 %v358, 7
    %361 = vset.pattern.permute.xlu0 %v359
    %362 = vperm.xlu0 %361, %v357
    %v363 = vpop.permute.xlu0 %362
    %v364 = vperm.slane %v354, 1
    %v365 = vlaneseq
    %v366 = vshrl.u32 %v365, 7
    %368 = vset.pattern.permute.xlu0 %v366
    %369 = vperm.xlu0 %368, %v364
    %v370 = vpop.permute.xlu0 %369
    %vm371 = vcmp.eq.s32.totalorder %v356, %v363
    %vm372 = vcmp.eq.s32.totalorder %v356, %v370
    %v373 = vsel %vm371, 1, 0
    %v374 = vsel %vm372, 1, 0
    %v375 = vcvt.s32.f32 %v373
    %v376 = vcvt.s32.f32 %v374
    %v377 = vld [vmem:[%s2] sm:$0xff]
    %v378 = vld [vmem:[%s2 + $0x8] sm:$0xff]
    %v379 = vld [vmem:[%s2 + $0x10] sm:$0xff]
    %v380 = vld [vmem:[%s2 + $0x18] sm:$0xff]
    %v381 = vld [vmem:[%s2 + $0x20] sm:$0xff]
    %v382 = vld [vmem:[%s2 + $0x28] sm:$0xff]
    %v383 = vld [vmem:[%s2 + $0x30] sm:$0xff]
    %v384 = vld [vmem:[%s2 + $0x38] sm:$0xff]
    %v385 = vld [vmem:[#allocation7] sm:$0xff]
    %vm386 = vcmask 523264
    %v388 = vsel %vm386, %v375, 0
    %v391 = vsel %vm386, %v376, 0
    %393 = vmatpush.msra.mxu0 0.0
    %394 = vmatpush.msra.mxu0 0.0
    %395 = vmatpush.msra.mxu0 0.0
    %396 = vmatpush.msra.mxu0 0.0
    %397 = vmatpush.msra.mxu0 0.0
    %398 = vmatpush.msra.mxu0 0.0
    %399 = vmatpush.msra.mxu0 0.0
    %400 = vmatpush.msra.mxu0 0.0
    %401 = vmatpush.msra.mxu0 %v384
    %402 = vmatpush.msra.mxu0 %v383
    %403 = vmatpush.msra.mxu0 %v382
    %404 = vmatpush.msra.mxu0 %v381
    %405 = vmatpush.msra.mxu0 %v380
    %406 = vmatpush.msra.mxu0 %v379
    %407 = vmatpush.msra.mxu0 %v378
    %408 = vmatpush.msra.mxu0 %v377
    %409 = vmatmul.f32.gmra.mxu0 %v388
    %v410 = vpop.f32.mrf.mxu0
    %v411 = vadd.f32 %v385, %v410
    %412 = vmatmul.f32.gmra.mxu0 %v391
    %v413 = vpop.f32.mrf.mxu0
    %v414 = vadd.f32 %v385, %v413
    %415 = vdwg.mxu0
    %v416 = vld [vmem:[#allocation8] sm:$0x1]
    %v418 = vperm.slane %v416, 0
    %v420 = vadd.f32 %v411, %v418
    %v421 = vadd.f32 %v414, %v418
    %v422 = vld [vmem:[#allocation10] sm:$0x1]
    %v423 = vld [vmem:[#allocation11] sm:$0x1]
    %vm424 = vcmask 261120
    %v425 = vsel %vm424, %v420, 0.0
    %426 = vadd.xlane.f32.xlu0 %v425
    %v427 = vpop.xlane.xlu0 %426
    %v428 = vsel %vm424, %v421, 0.0
    %429 = vadd.xlane.f32.xlu0 %v428
    %v430 = vpop.xlane.xlu0 %429
    %v431 = vrcp.pop 32.0
    %v432 = vmul.f32 32.0, %v431
    %v433 = vsub.f32 1.0, %v432
    %v434 = vmul.f32 %v431, %v433
    %v435 = vadd.f32 %v431, %v434
    %vm436 = vweird.f32 %v431
    %v437 = vsel %vm436, %v431, %v435
    %v438 = vmul.f32 %v427, %v437
    %v439 = vmul.f32 %v430, %v437
    %v440 = vmul.f32 %v420, %v420
    %v441 = vmul.f32 %v421, %v421
    %v442 = vsel %vm424, %v440, 0.0
    %443 = vadd.xlane.f32.xlu0 %v442
    %v444 = vpop.xlane.xlu0 %443
    %v445 = vsel %vm424, %v441, 0.0
    %446 = vadd.xlane.f32.xlu0 %v445
    %v447 = vpop.xlane.xlu0 %446
    %v448 = vmul.f32 %v444, %v437
    %v449 = vmul.f32 %v447, %v437
    %v450 = vmul.f32 %v438, %v438
    %v451 = vmul.f32 %v439, %v439
    %v452 = vsub.f32 %v448, %v450
    %v453 = vsub.f32 %v449, %v451
    %v454 = vsub.f32 %v420, %v438
    %v455 = vsub.f32 %v421, %v439
    %v456 = vadd.f32 %v452, 1e-12
    %v457 = vadd.f32 %v453, 1e-12
    %v458 = vrsqrt.pop %v456
    %v459 = vmul.f32 %v458, %v456
    %v460 = vmul.f32 %v459, %v458
    %v461 = vmul.f32 0.5, %v460
    %v462 = vsub.f32 1.5, %v461
    %v463 = vmul.f32 %v458, %v462
    %vm464 = vweird.f32 %v456
    %vm465 = vweird.f32 %v458
    %vm466 = vmor %vm464, %vm465
    %v467 = vsel %vm466, %v458, %v463
    %v468 = vrsqrt.pop %v457
    %v469 = vmul.f32 %v468, %v457
    %v470 = vmul.f32 %v469, %v468
    %v471 = vmul.f32 0.5, %v470
    %v472 = vsub.f32 1.5, %v471
    %v473 = vmul.f32 %v468, %v472
    %vm474 = vweird.f32 %v457
    %vm475 = vweird.f32 %v468
    %vm476 = vmor %vm474, %vm475
    %v477 = vsel %vm476, %v468, %v473
    %v478 = vmul.f32 %v454, %v467
    %v479 = vmul.f32 %v455, %v477
    %v481 = vperm.slane %v422, 0
    %v483 = vmul.f32 %v478, %v481
    %v484 = vmul.f32 %v479, %v481
    %v486 = vperm.slane %v423, 0
    %v488 = vadd.f32 %v483, %v486
    %v489 = vadd.f32 %v484, %v486
    %v490 = vld [vmem:[#allocation5] sm:$0x3]
    %v491 = vcvt.s32.f32 %v490
    %v492 = vsub.f32 1.0, %v491
    %v493 = vmul.f32 %v492, -10000.0
    %v495 = vrot.slane %v493, 1
    %v496 = vld [vmem:[%s7] sm:$0xf]
    %v497 = vld [vmem:[%s7 + $0x4] sm:$0xf]
    %v498 = vld [vmem:[%s7 + $0x8] sm:$0xf]
    %v499 = vld [vmem:[%s7 + $0xc] sm:$0xf]
    %v500 = vld [vmem:[#allocation13] sm:$0x1]
    %v501 = vld [vmem:[#allocation14] sm:$0xf]
    %v502 = vld [vmem:[#allocation14 + $0x4] sm:$0xf]
    %v503 = vld [vmem:[#allocation14 + $0x8] sm:$0xf]
    %v504 = vld [vmem:[#allocation14 + $0xc] sm:$0xf]
    %v505 = vld [vmem:[#allocation16] sm:$0x1]
    %v506 = vld [vmem:[#allocation17] sm:$0x1]
    %v507 = vld [vmem:[#allocation19] sm:$0x1]
    %v508 = vld [vmem:[#allocation20] sm:$0xf]
    %v509 = vld [vmem:[#allocation20 + $0x4] sm:$0xf]
    %v510 = vld [vmem:[#allocation20 + $0x8] sm:$0xf]
    %v511 = vld [vmem:[#allocation20 + $0xc] sm:$0xf]
    %v512 = vld [vmem:[#allocation22] sm:$0x1]
    %v513 = vld [vmem:[%s15] sm:$0xf]
    %v514 = vld [vmem:[%s15 + $0x4] sm:$0xf]
    %v515 = vld [vmem:[%s15 + $0x8] sm:$0xf]
    %v516 = vld [vmem:[%s15 + $0xc] sm:$0xf]
    %v517 = vld [vmem:[%s15 + $0x10] sm:$0xf]
    %v518 = vld [vmem:[%s15 + $0x14] sm:$0xf]
    %v519 = vld [vmem:[%s15 + $0x18] sm:$0xf]
    %v520 = vld [vmem:[%s15 + $0x1c] sm:$0xf]
    %v521 = vld [vmem:[%s15 + $0x20] sm:$0xf]
    %v522 = vld [vmem:[%s15 + $0x24] sm:$0xf]
    %v523 = vld [vmem:[%s15 + $0x28] sm:$0xf]
    %v524 = vld [vmem:[%s15 + $0x2c] sm:$0xf]
    %v525 = vld [vmem:[%s15 + $0x30] sm:$0xf]
    %v526 = vld [vmem:[%s15 + $0x34] sm:$0xf]
    %v527 = vld [vmem:[%s15 + $0x38] sm:$0xf]
    %v528 = vld [vmem:[%s15 + $0x3c] sm:$0xf]
    %v529 = vld [vmem:[#allocation23] sm:$0x1]
    %v530 = vld [vmem:[#allocation25] sm:$0x1]
    %v531 = vld [vmem:[#allocation26] sm:$0x1]
    %v532 = vpack.c.bf16 %v488, %v488
    %v533 = vpack.c.bf16 %v489, %v489
    %v535 = vperm.slane %v500, 0
    %v539 = vunpack.c.l.b16 %v532
    %v540 = vunpack.c.l.b16 %v533
    %v541 = vpack.c.b16 %v540, %v539
    %v546 = vunpack.c.l.b16 %v496
    %v547 = vunpack.c.l.b16 %v497
    %v548 = vunpack.c.l.b16 %v498
    %v549 = vunpack.c.l.b16 %v499
    %v550 = vpack.c.b16 %v547, %v546
    %v551 = vpack.c.b16 %v549, %v548
    %v555 = vsel %vm424, %v541, 0
    %557 = vmatpush.bf16.msra.mxu0 0
    %558 = vmatpush.bf16.msra.mxu0 0
    %559 = vmatpush.bf16.msra.mxu0 0
    %560 = vmatpush.bf16.msra.mxu0 0
    %561 = vmatpush.bf16.msra.mxu0 0
    %562 = vmatpush.bf16.msra.mxu0 0
    %563 = vmatpush.bf16.msra.mxu0 %v551
    %564 = vmatpush.bf16.msra.mxu0 %v550
    %565 = vmatmul.bf16.gmra.mxu0 %v555
    %v566 = vpop.f32.mrf.mxu0
    %v567 = vadd.f32 %v535, %v566
    %v568 = vpop.f32.mrf.mxu0
    %v569 = vadd.f32 %v535, %v568
    %570 = vdwg.mxu0
    %v571 = vpack.c.bf16 %v567, %v567
    %v572 = vpack.c.bf16 %v569, %v569
    %v574 = vunpack.c.l.b16 %v571
    %v575 = vpack.c.b16 %v574, %v574
    %576 = vrot.lane.b32.xlu0 %v575, 96
    %v577 = vpop.permute.xlu0 %576
    %v579 = vsel %vm424, %v571, 0
    %v582 = vsel %vm424, %v577, 0
    %584 = vmatpush.bf16.xpose.msra.mxu0 0
    %585 = vmatpush.bf16.xpose.msra.mxu0 0
    %586 = vmatpush.bf16.xpose.msra.mxu0 0
    %587 = vmatpush.bf16.xpose.msra.mxu0 0
    %588 = vmatpush.bf16.xpose.msra.mxu0 0
    %589 = vmatpush.bf16.xpose.msra.mxu0 0
    %590 = vmatpush.bf16.xpose.msra.mxu0 0
    %591 = vmatpush.bf16.xpose.msra.mxu0 %v582
    %592 = vmatmul.bf16.gmra.mxu0 %v579
    %v593 = vpop.f32.mrf.mxu0
    %v594 = vadd.f32 0.0, %v593
    %v595 = vpop.f32.mrf.mxu0
    %596 = vdwg.mxu0
    %v598 = vunpack.c.l.b16 %v572
    %v599 = vpack.c.b16 %v598, %v598
    %600 = vrot.lane.b32.xlu0 %v599, 96
    %v601 = vpop.permute.xlu0 %600
    %v603 = vsel %vm424, %v572, 0
    %v606 = vsel %vm424, %v601, 0
    %608 = vmatpush.bf16.xpose.msra.mxu0 0
    %609 = vmatpush.bf16.xpose.msra.mxu0 0
    %610 = vmatpush.bf16.xpose.msra.mxu0 0
    %611 = vmatpush.bf16.xpose.msra.mxu0 0
    %612 = vmatpush.bf16.xpose.msra.mxu0 0
    %613 = vmatpush.bf16.xpose.msra.mxu0 0
    %614 = vmatpush.bf16.xpose.msra.mxu0 0
    %615 = vmatpush.bf16.xpose.msra.mxu0 %v606
    %616 = vmatmul.bf16.gmra.mxu0 %v603
    %v617 = vpop.f32.mrf.mxu0
    %v618 = vadd.f32 0.0, %v617
    %v619 = vpop.f32.mrf.mxu0
    %620 = vdwg.mxu0
    %v621 = vmul.f32 %v594, 0.17677669
    %v622 = vmul.f32 %v618, 0.17677669
    %v623 = vperm.slane %v493, 0
    %v624 = vperm.slane %v495, 0
    %v627 = vadd.f32 %v621, %v623
    %v628 = vadd.f32 %v622, %v624
    %v629 = vmul.f32 %v627, 1.442695
    %v630 = vpow.pop %v629
    %v631 = vmul.f32 %v628, 1.442695
    %v632 = vpow.pop %v631
    %vm633 = vcmask 64512
    %v634 = vsel %vm633, %v630, 0.0
    %635 = vadd.xlane.f32.xlu0 %v634
    %v636 = vpop.xlane.xlu0 %635
    %v637 = vsel %vm633, %v632, 0.0
    %638 = vadd.xlane.f32.xlu0 %v637
    %v639 = vpop.xlane.xlu0 %638
    %v640 = vrcp.pop %v636
    %v641 = vrcp.pop %v639
    %v642 = vmul.f32 %v630, %v640
    %v643 = vmul.f32 %v632, %v641
    %v644 = vpack.c.bf16 %v642, %v642
    %v645 = vpack.c.bf16 %v643, %v643
    %646 = vrot.lane.b32.xlu0 %v575, 64
    %v647 = vpop.permute.xlu0 %646
    %v649 = vsel %vm633, %v644, 0
    %vm651 = vcmask 1043456
    %v653 = vsel %vm651, %v647, 0
    %655 = vmatpush.bf16.msra.mxu0 0
    %656 = vmatpush.bf16.msra.mxu0 0
    %657 = vmatpush.bf16.msra.mxu0 0
    %658 = vmatpush.bf16.msra.mxu0 0
    %659 = vmatpush.bf16.msra.mxu0 0
    %660 = vmatpush.bf16.msra.mxu0 0
    %661 = vmatpush.bf16.msra.mxu0 0
    %662 = vmatpush.bf16.msra.mxu0 %v653
    %663 = vmatmul.bf16.gmra.mxu0 %v649
    %v664 = vpop.f32.mrf.mxu0
    %v665 = vadd.f32 0.0, %v664
    %v666 = vpop.f32.mrf.mxu0
    %667 = vdwg.mxu0
    %668 = vrot.lane.b32.xlu0 %v599, 64
    %v669 = vpop.permute.xlu0 %668
    %v671 = vsel %vm633, %v645, 0
    %v674 = vsel %vm651, %v669, 0
    %676 = vmatpush.bf16.msra.mxu0 0
    %677 = vmatpush.bf16.msra.mxu0 0
    %678 = vmatpush.bf16.msra.mxu0 0
    %679 = vmatpush.bf16.msra.mxu0 0
    %680 = vmatpush.bf16.msra.mxu0 0
    %681 = vmatpush.bf16.msra.mxu0 0
    %682 = vmatpush.bf16.msra.mxu0 0
    %683 = vmatpush.bf16.msra.mxu0 %v674
    %684 = vmatmul.bf16.gmra.mxu0 %v671
    %v685 = vpop.f32.mrf.mxu0
    %v686 = vadd.f32 0.0, %v685
    %v687 = vpop.f32.mrf.mxu0
    %688 = vdwg.mxu0
    %v689 = vpack.c.bf16 %v665, %v665
    %v690 = vpack.c.bf16 %v686, %v686
    %v692 = vperm.slane %v505, 0
    %v696 = vunpack.c.l.b16 %v689
    %v697 = vunpack.c.l.b16 %v690
    %v698 = vpack.c.b16 %v697, %v696
    %v703 = vunpack.c.l.b16 %v501
    %v704 = vunpack.c.l.b16 %v502
    %v705 = vunpack.c.l.b16 %v503
    %v706 = vunpack.c.l.b16 %v504
    %v707 = vpack.c.b16 %v704, %v703
    %v708 = vpack.c.b16 %v706, %v705
    %v712 = vsel %vm424, %v698, 0
    %714 = vmatpush.bf16.msra.mxu0 0
    %715 = vmatpush.bf16.msra.mxu0 0
    %716 = vmatpush.bf16.msra.mxu0 0
    %717 = vmatpush.bf16.msra.mxu0 0
    %718 = vmatpush.bf16.msra.mxu0 0
    %719 = vmatpush.bf16.msra.mxu0 0
    %720 = vmatpush.bf16.msra.mxu0 %v708
    %721 = vmatpush.bf16.msra.mxu0 %v707
    %722 = vmatmul.bf16.gmra.mxu0 %v712
    %v723 = vpop.f32.mrf.mxu0
    %v724 = vadd.f32 %v692, %v723
    %v725 = vpop.f32.mrf.mxu0
    %v726 = vadd.f32 %v692, %v725
    %727 = vdwg.mxu0
    %v728 = vadd.f32 %v488, %v724
    %v729 = vadd.f32 %v489, %v726
    %v730 = vsel %vm424, %v728, 0.0
    %731 = vadd.xlane.f32.xlu0 %v730
    %v732 = vpop.xlane.xlu0 %731
    %v733 = vsel %vm424, %v729, 0.0
    %734 = vadd.xlane.f32.xlu0 %v733
    %v735 = vpop.xlane.xlu0 %734
    %v736 = vmul.f32 %v732, %v437
    %v737 = vmul.f32 %v735, %v437
    %v738 = vmul.f32 %v728, %v728
    %v739 = vmul.f32 %v729, %v729
    %v740 = vsel %vm424, %v738, 0.0
    %741 = vadd.xlane.f32.xlu0 %v740
    %v742 = vpop.xlane.xlu0 %741
    %v743 = vsel %vm424, %v739, 0.0
    %744 = vadd.xlane.f32.xlu0 %v743
    %v745 = vpop.xlane.xlu0 %744
    %v746 = vmul.f32 %v742, %v437
    %v747 = vmul.f32 %v745, %v437
    %v748 = vmul.f32 %v736, %v736
    %v749 = vmul.f32 %v737, %v737
    %v750 = vsub.f32 %v746, %v748
    %v751 = vsub.f32 %v747, %v749
    %v752 = vsub.f32 %v728, %v736
    %v753 = vsub.f32 %v729, %v737
    %v754 = vadd.f32 %v750, 1e-12
    %v755 = vadd.f32 %v751, 1e-12
    %v756 = vrsqrt.pop %v754
    %v757 = vmul.f32 %v756, %v754
    %v758 = vmul.f32 %v757, %v756
    %v759 = vmul.f32 0.5, %v758
    %v760 = vsub.f32 1.5, %v759
    %v761 = vmul.f32 %v756, %v760
    %vm762 = vweird.f32 %v754
    %vm763 = vweird.f32 %v756
    %vm764 = vmor %vm762, %vm763
    %v765 = vsel %vm764, %v756, %v761
    %v766 = vrsqrt.pop %v755
    %v767 = vmul.f32 %v766, %v755
    %v768 = vmul.f32 %v767, %v766
    %v769 = vmul.f32 0.5, %v768
    %v770 = vsub.f32 1.5, %v769
    %v771 = vmul.f32 %v766, %v770
    %vm772 = vweird.f32 %v755
    %vm773 = vweird.f32 %v766
    %vm774 = vmor %vm772, %vm773
    %v775 = vsel %vm774, %v766, %v771
    %v776 = vmul.f32 %v752, %v765
    %v777 = vmul.f32 %v753, %v775
    %v779 = vperm.slane %v506, 0
    %v781 = vmul.f32 %v776, %v779
    %v782 = vmul.f32 %v777, %v779
    %v784 = vperm.slane %v507, 0
    %v786 = vadd.f32 %v781, %v784
    %v787 = vadd.f32 %v782, %v784
    %v788 = vpack.c.bf16 %v786, %v786
    %v789 = vpack.c.bf16 %v787, %v787
    %v791 = vperm.slane %v512, 0
    %v795 = vunpack.c.l.b16 %v788
    %v796 = vunpack.c.l.b16 %v789
    %v797 = vpack.c.b16 %v796, %v795
    %v802 = vunpack.c.l.b16 %v508
    %v803 = vunpack.c.l.b16 %v509
    %v804 = vunpack.c.l.b16 %v510
    %v805 = vunpack.c.l.b16 %v511
    %v806 = vpack.c.b16 %v803, %v802
    %v807 = vpack.c.b16 %v805, %v804
    %v811 = vsel %vm424, %v797, 0
    %813 = vmatpush.bf16.msra.mxu0 0
    %814 = vmatpush.bf16.msra.mxu0 0
    %815 = vmatpush.bf16.msra.mxu0 0
    %816 = vmatpush.bf16.msra.mxu0 0
    %817 = vmatpush.bf16.msra.mxu0 0
    %818 = vmatpush.bf16.msra.mxu0 0
    %819 = vmatpush.bf16.msra.mxu0 %v807
    %820 = vmatpush.bf16.msra.mxu0 %v806
    %821 = vmatmul.bf16.gmra.mxu0 %v811
    %v822 = vpop.f32.mrf.mxu0
    %v823 = vadd.f32 %v791, %v822
    %v824 = vpop.f32.mrf.mxu0
    %v825 = vadd.f32 %v791, %v824
    %826 = vdwg.mxu0
    %v827 = vmul.f32 %v823, 0.5
    %v828 = vmul.f32 %v825, 0.5
    %v829 = vmul.f32 %v823, 0.044715
    %v830 = vmul.f32 %v825, 0.044715
    %v831 = vmul.f32 %v829, %v823
    %v832 = vmul.f32 %v830, %v825
    %v833 = vmul.f32 %v831, %v823
    %v834 = vmul.f32 %v832, %v825
    %v835 = vadd.f32 %v823, %v833
    %v836 = vadd.f32 %v825, %v834
    %v837 = vmul.f32 %v835, 0.7978846
    %v838 = vmul.f32 %v836, 0.7978846
    %v839 = vtanh.pop %v837
    %v840 = vtanh.pop %v838
    %v841 = vadd.f32 %v839, 1.0
    %v842 = vadd.f32 %v840, 1.0
    %v843 = vmul.f32 %v827, %v841
    %v844 = vmul.f32 %v828, %v842
    %v845 = vpack.c.bf16 %v843, %v843
    %v846 = vpack.c.bf16 %v844, %v844
    %v848 = vperm.slane %v529, 0
    %v852 = vunpack.c.l.b16 %v845
    %v853 = vunpack.c.l.b16 %v846
    %v854 = vpack.c.b16 %v853, %v852
    %v872 = vunpack.c.l.b16 %v513
    %v873 = vunpack.c.l.b16 %v514
    %v874 = vunpack.c.l.b16 %v515
    %v875 = vunpack.c.l.b16 %v516
    %v876 = vunpack.c.l.b16 %v517
    %v877 = vunpack.c.l.b16 %v518
    %v878 = vunpack.c.l.b16 %v519
    %v879 = vunpack.c.l.b16 %v520
    %v880 = vunpack.c.l.b16 %v521
    %v881 = vunpack.c.l.b16 %v522
    %v882 = vunpack.c.l.b16 %v523
    %v883 = vunpack.c.l.b16 %v524
    %v884 = vunpack.c.l.b16 %v525
    %v885 = vunpack.c.l.b16 %v526
    %v886 = vunpack.c.l.b16 %v527
    %v887 = vunpack.c.l.b16 %v528
    %v888 = vpack.c.b16 %v873, %v872
    %v889 = vpack.c.b16 %v875, %v874
    %v890 = vpack.c.b16 %v877, %v876
    %v891 = vpack.c.b16 %v879, %v878
    %v892 = vpack.c.b16 %v881, %v880
    %v893 = vpack.c.b16 %v883, %v882
    %v894 = vpack.c.b16 %v885, %v884
    %v895 = vpack.c.b16 %v887, %v886
    %904 = vmatpush.bf16.msra.mxu0 %v895
    %905 = vmatpush.bf16.msra.mxu0 %v894
    %906 = vmatpush.bf16.msra.mxu0 %v893
    %907 = vmatpush.bf16.msra.mxu0 %v892
    %908 = vmatpush.bf16.msra.mxu0 %v891
    %909 = vmatpush.bf16.msra.mxu0 %v890
    %910 = vmatpush.bf16.msra.mxu0 %v889
    %911 = vmatpush.bf16.msra.mxu0 %v888
    %912 = vmatmul.bf16.gmra.mxu0 %v854
    %v913 = vpop.f32.mrf.mxu0
    %v914 = vadd.f32 %v848, %v913
    %v915 = vpop.f32.mrf.mxu0
    %v916 = vadd.f32 %v848, %v915
    %917 = vdwg.mxu0
    %v918 = vadd.f32 %v786, %v914
    %v919 = vadd.f32 %v787, %v916
    %v920 = vsel %vm424, %v918, 0.0
    %921 = vadd.xlane.f32.xlu0 %v920
    %v922 = vpop.xlane.xlu0 %921
    %v923 = vsel %vm424, %v919, 0.0
    %924 = vadd.xlane.f32.xlu0 %v923
    %v925 = vpop.xlane.xlu0 %924
    %v926 = vmul.f32 %v922, %v437
    %v927 = vmul.f32 %v925, %v437
    %v928 = vmul.f32 %v918, %v918
    %v929 = vmul.f32 %v919, %v919
    %v930 = vsel %vm424, %v928, 0.0
    %931 = vadd.xlane.f32.xlu0 %v930
    %v932 = vpop.xlane.xlu0 %931
    %v933 = vsel %vm424, %v929, 0.0
    %934 = vadd.xlane.f32.xlu0 %v933
    %v935 = vpop.xlane.xlu0 %934
    %v936 = vmul.f32 %v932, %v437
    %v937 = vmul.f32 %v935, %v437
    %v938 = vmul.f32 %v926, %v926
    %v939 = vmul.f32 %v927, %v927
    %v940 = vsub.f32 %v936, %v938
    %v941 = vsub.f32 %v937, %v939
    %v942 = vsub.f32 %v918, %v926
    %v943 = vsub.f32 %v919, %v927
    %v944 = vadd.f32 %v940, 1e-12
    %v945 = vadd.f32 %v941, 1e-12
    %v946 = vrsqrt.pop %v944
    %v947 = vmul.f32 %v946, %v944
    %v948 = vmul.f32 %v947, %v946
    %v949 = vmul.f32 0.5, %v948
    %v950 = vsub.f32 1.5, %v949
    %v951 = vmul.f32 %v946, %v950
    %vm952 = vweird.f32 %v944
    %vm953 = vweird.f32 %v946
    %vm954 = vmor %vm952, %vm953
    %v955 = vsel %vm954, %v946, %v951
    %v956 = vrsqrt.pop %v945
    %v957 = vmul.f32 %v956, %v945
    %v958 = vmul.f32 %v957, %v956
    %v959 = vmul.f32 0.5, %v958
    %v960 = vsub.f32 1.5, %v959
    %v961 = vmul.f32 %v956, %v960
    %vm962 = vweird.f32 %v945
    %vm963 = vweird.f32 %v956
    %vm964 = vmor %vm962, %vm963
    %v965 = vsel %vm964, %v956, %v961
    %v966 = vmul.f32 %v942, %v955
    %v967 = vmul.f32 %v943, %v965
    %v969 = vperm.slane %v530, 0
    %v971 = vmul.f32 %v966, %v969
    %v972 = vmul.f32 %v967, %v969
    %v974 = vperm.slane %v531, 0
    %v976 = vadd.f32 %v971, %v974
    %v977 = vadd.f32 %v972, %v974
    %s978 = scalar_lea.vmem %s7, 16
    %v979 = vld [vmem:[%s978] sm:$0xf]
    %v980 = vld [vmem:[%s978 + $0x4] sm:$0xf]
    %v981 = vld [vmem:[%s978 + $0x8] sm:$0xf]
    %v982 = vld [vmem:[%s978 + $0xc] sm:$0xf]
    %s983 = scalar_lea.vmem [#allocation13], 1
    %v984 = vld [vmem:[%s983] sm:$0x1]
    %s985 = scalar_lea.vmem [#allocation14], 16
    %v986 = vld [vmem:[%s985] sm:$0xf]
    %v987 = vld [vmem:[%s985 + $0x4] sm:$0xf]
    %v988 = vld [vmem:[%s985 + $0x8] sm:$0xf]
    %v989 = vld [vmem:[%s985 + $0xc] sm:$0xf]
    %s990 = scalar_lea.vmem [#allocation16], 1
    %v991 = vld [vmem:[%s990] sm:$0x1]
    %s992 = scalar_lea.vmem [#allocation17], 1
    %v993 = vld [vmem:[%s992] sm:$0x1]
    %s994 = scalar_lea.vmem [#allocation19], 1
    %v995 = vld [vmem:[%s994] sm:$0x1]
    %s996 = scalar_lea.vmem [#allocation20], 16
    %v997 = vld [vmem:[%s996] sm:$0xf]
    %v998 = vld [vmem:[%s996 + $0x4] sm:$0xf]
    %v999 = vld [vmem:[%s996 + $0x8] sm:$0xf]
    %v1000 = vld [vmem:[%s996 + $0xc] sm:$0xf]
    %s1001 = scalar_lea.vmem [#allocation22], 1
    %v1002 = vld [vmem:[%s1001] sm:$0x1]
    %s1003 = scalar_lea.vmem %s15, 64
    %v1004 = vld [vmem:[%s1003] sm:$0xf]
    %v1005 = vld [vmem:[%s1003 + $0x4] sm:$0xf]
    %v1006 = vld [vmem:[%s1003 + $0x8] sm:$0xf]
    %v1007 = vld [vmem:[%s1003 + $0xc] sm:$0xf]
    %v1008 = vld [vmem:[%s1003 + $0x10] sm:$0xf]
    %v1009 = vld [vmem:[%s1003 + $0x14] sm:$0xf]
    %v1010 = vld [vmem:[%s1003 + $0x18] sm:$0xf]
    %v1011 = vld [vmem:[%s1003 + $0x1c] sm:$0xf]
    %v1012 = vld [vmem:[%s1003 + $0x20] sm:$0xf]
    %v1013 = vld [vmem:[%s1003 + $0x24] sm:$0xf]
    %v1014 = vld [vmem:[%s1003 + $0x28] sm:$0xf]
    %v1015 = vld [vmem:[%s1003 + $0x2c] sm:$0xf]
    %v1016 = vld [vmem:[%s1003 + $0x30] sm:$0xf]
    %v1017 = vld [vmem:[%s1003 + $0x34] sm:$0xf]
    %v1018 = vld [vmem:[%s1003 + $0x38] sm:$0xf]
    %v1019 = vld [vmem:[%s1003 + $0x3c] sm:$0xf]
    %s1020 = scalar_lea.vmem [#allocation23], 1
    %v1021 = vld [vmem:[%s1020] sm:$0x1]
    %s1022 = scalar_lea.vmem [#allocation25], 1
    %v1023 = vld [vmem:[%s1022] sm:$0x1]
    %s1024 = scalar_lea.vmem [#allocation26], 1
    %v1025 = vld [vmem:[%s1024] sm:$0x1]
    %v1026 = vpack.c.bf16 %v976, %v976
    %v1027 = vpack.c.bf16 %v977, %v977
    %v1029 = vperm.slane %v984, 0
    %v1033 = vunpack.c.l.b16 %v1026
    %v1034 = vunpack.c.l.b16 %v1027
    %v1035 = vpack.c.b16 %v1034, %v1033
    %v1040 = vunpack.c.l.b16 %v979
    %v1041 = vunpack.c.l.b16 %v980
    %v1042 = vunpack.c.l.b16 %v981
    %v1043 = vunpack.c.l.b16 %v982
    %v1044 = vpack.c.b16 %v1041, %v1040
    %v1045 = vpack.c.b16 %v1043, %v1042
    %v1049 = vsel %vm424, %v1035, 0
    %1051 = vmatpush.bf16.msra.mxu0 0
    %1052 = vmatpush.bf16.msra.mxu0 0
    %1053 = vmatpush.bf16.msra.mxu0 0
    %1054 = vmatpush.bf16.msra.mxu0 0
    %1055 = vmatpush.bf16.msra.mxu0 0
    %1056 = vmatpush.bf16.msra.mxu0 0
    %1057 = vmatpush.bf16.msra.mxu0 %v1045
    %1058 = vmatpush.bf16.msra.mxu0 %v1044
    %1059 = vmatmul.bf16.gmra.mxu0 %v1049
    %v1060 = vpop.f32.mrf.mxu0
    %v1061 = vadd.f32 %v1029, %v1060
    %v1062 = vpop.f32.mrf.mxu0
    %v1063 = vadd.f32 %v1029, %v1062
    %1064 = vdwg.mxu0
    %v1065 = vpack.c.bf16 %v1061, %v1061
    %v1066 = vpack.c.bf16 %v1063, %v1063
    %v1068 = vunpack.c.l.b16 %v1065
    %v1069 = vpack.c.b16 %v1068, %v1068
    %1070 = vrot.lane.b32.xlu0 %v1069, 96
    %v1071 = vpop.permute.xlu0 %1070
    %v1073 = vsel %vm424, %v1065, 0
    %v1076 = vsel %vm424, %v1071, 0
    %1078 = vmatpush.bf16.xpose.msra.mxu0 0
    %1079 = vmatpush.bf16.xpose.msra.mxu0 0
    %1080 = vmatpush.bf16.xpose.msra.mxu0 0
    %1081 = vmatpush.bf16.xpose.msra.mxu0 0
    %1082 = vmatpush.bf16.xpose.msra.mxu0 0
    %1083 = vmatpush.bf16.xpose.msra.mxu0 0
    %1084 = vmatpush.bf16.xpose.msra.mxu0 0
    %1085 = vmatpush.bf16.xpose.msra.mxu0 %v1076
    %1086 = vmatmul.bf16.gmra.mxu0 %v1073
    %v1087 = vpop.f32.mrf.mxu0
    %v1088 = vadd.f32 0.0, %v1087
    %v1089 = vpop.f32.mrf.mxu0
    %1090 = vdwg.mxu0
    %v1092 = vunpack.c.l.b16 %v1066
    %v1093 = vpack.c.b16 %v1092, %v1092
    %1094 = vrot.lane.b32.xlu0 %v1093, 96
    %v1095 = vpop.permute.xlu0 %1094
    %v1097 = vsel %vm424, %v1066, 0
    %v1100 = vsel %vm424, %v1095, 0
    %1102 = vmatpush.bf16.xpose.msra.mxu0 0
    %1103 = vmatpush.bf16.xpose.msra.mxu0 0
    %1104 = vmatpush.bf16.xpose.msra.mxu0 0
    %1105 = vmatpush.bf16.xpose.msra.mxu0 0
    %1106 = vmatpush.bf16.xpose.msra.mxu0 0
    %1107 = vmatpush.bf16.xpose.msra.mxu0 0
    %1108 = vmatpush.bf16.xpose.msra.mxu0 0
    %1109 = vmatpush.bf16.xpose.msra.mxu0 %v1100
    %1110 = vmatmul.bf16.gmra.mxu0 %v1097
    %v1111 = vpop.f32.mrf.mxu0
    %v1112 = vadd.f32 0.0, %v1111
    %v1113 = vpop.f32.mrf.mxu0
    %1114 = vdwg.mxu0
    %v1115 = vmul.f32 %v1088, 0.17677669
    %v1116 = vmul.f32 %v1112, 0.17677669
    %v1117 = vadd.f32 %v1115, %v623
    %v1118 = vadd.f32 %v1116, %v624
    %v1119 = vmul.f32 %v1117, 1.442695
    %v1120 = vpow.pop %v1119
    %v1121 = vmul.f32 %v1118, 1.442695
    %v1122 = vpow.pop %v1121
    %v1123 = vsel %vm633, %v1120, 0.0
    %1124 = vadd.xlane.f32.xlu0 %v1123
    %v1125 = vpop.xlane.xlu0 %1124
    %v1126 = vsel %vm633, %v1122, 0.0
    %1127 = vadd.xlane.f32.xlu0 %v1126
    %v1128 = vpop.xlane.xlu0 %1127
    %v1129 = vrcp.pop %v1125
    %v1130 = vrcp.pop %v1128
    %v1131 = vmul.f32 %v1120, %v1129
    %v1132 = vmul.f32 %v1122, %v1130
    %v1133 = vpack.c.bf16 %v1131, %v1131
    %v1134 = vpack.c.bf16 %v1132, %v1132
    %1135 = vrot.lane.b32.xlu0 %v1069, 64
    %v1136 = vpop.permute.xlu0 %1135
    %v1138 = vsel %vm633, %v1133, 0
    %v1141 = vsel %vm651, %v1136, 0
    %1143 = vmatpush.bf16.msra.mxu0 0
    %1144 = vmatpush.bf16.msra.mxu0 0
    %1145 = vmatpush.bf16.msra.mxu0 0
    %1146 = vmatpush.bf16.msra.mxu0 0
    %1147 = vmatpush.bf16.msra.mxu0 0
    %1148 = vmatpush.bf16.msra.mxu0 0
    %1149 = vmatpush.bf16.msra.mxu0 0
    %1150 = vmatpush.bf16.msra.mxu0 %v1141
    %1151 = vmatmul.bf16.gmra.mxu0 %v1138
    %v1152 = vpop.f32.mrf.mxu0
    %v1153 = vadd.f32 0.0, %v1152
    %v1154 = vpop.f32.mrf.mxu0
    %1155 = vdwg.mxu0
    %1156 = vrot.lane.b32.xlu0 %v1093, 64
    %v1157 = vpop.permute.xlu0 %1156
    %v1159 = vsel %vm633, %v1134, 0
    %v1162 = vsel %vm651, %v1157, 0
    %1164 = vmatpush.bf16.msra.mxu0 0
    %1165 = vmatpush.bf16.msra.mxu0 0
    %1166 = vmatpush.bf16.msra.mxu0 0
    %1167 = vmatpush.bf16.msra.mxu0 0
    %1168 = vmatpush.bf16.msra.mxu0 0
    %1169 = vmatpush.bf16.msra.mxu0 0
    %1170 = vmatpush.bf16.msra.mxu0 0
    %1171 = vmatpush.bf16.msra.mxu0 %v1162
    %1172 = vmatmul.bf16.gmra.mxu0 %v1159
    %v1173 = vpop.f32.mrf.mxu0
    %v1174 = vadd.f32 0.0, %v1173
    %v1175 = vpop.f32.mrf.mxu0
    %1176 = vdwg.mxu0
    %v1177 = vpack.c.bf16 %v1153, %v1153
    %v1178 = vpack.c.bf16 %v1174, %v1174
    %v1180 = vperm.slane %v991, 0
    %v1184 = vunpack.c.l.b16 %v1177
    %v1185 = vunpack.c.l.b16 %v1178
    %v1186 = vpack.c.b16 %v1185, %v1184
    %v1191 = vunpack.c.l.b16 %v986
    %v1192 = vunpack.c.l.b16 %v987
    %v1193 = vunpack.c.l.b16 %v988
    %v1194 = vunpack.c.l.b16 %v989
    %v1195 = vpack.c.b16 %v1192, %v1191
    %v1196 = vpack.c.b16 %v1194, %v1193
    %v1200 = vsel %vm424, %v1186, 0
    %1202 = vmatpush.bf16.msra.mxu0 0
    %1203 = vmatpush.bf16.msra.mxu0 0
    %1204 = vmatpush.bf16.msra.mxu0 0
    %1205 = vmatpush.bf16.msra.mxu0 0
    %1206 = vmatpush.bf16.msra.mxu0 0
    %1207 = vmatpush.bf16.msra.mxu0 0
    %1208 = vmatpush.bf16.msra.mxu0 %v1196
    %1209 = vmatpush.bf16.msra.mxu0 %v1195
    %1210 = vmatmul.bf16.gmra.mxu0 %v1200
    %v1211 = vpop.f32.mrf.mxu0
    %v1212 = vadd.f32 %v1180, %v1211
    %v1213 = vpop.f32.mrf.mxu0
    %v1214 = vadd.f32 %v1180, %v1213
    %1215 = vdwg.mxu0
    %v1216 = vadd.f32 %v976, %v1212
    %v1217 = vadd.f32 %v977, %v1214
    %v1218 = vsel %vm424, %v1216, 0.0
    %1219 = vadd.xlane.f32.xlu0 %v1218
    %v1220 = vpop.xlane.xlu0 %1219
    %v1221 = vsel %vm424, %v1217, 0.0
    %1222 = vadd.xlane.f32.xlu0 %v1221
    %v1223 = vpop.xlane.xlu0 %1222
    %v1224 = vmul.f32 %v1220, %v437
    %v1225 = vmul.f32 %v1223, %v437
    %v1226 = vmul.f32 %v1216, %v1216
    %v1227 = vmul.f32 %v1217, %v1217
    %v1228 = vsel %vm424, %v1226, 0.0
    %1229 = vadd.xlane.f32.xlu0 %v1228
    %v1230 = vpop.xlane.xlu0 %1229
    %v1231 = vsel %vm424, %v1227, 0.0
    %1232 = vadd.xlane.f32.xlu0 %v1231
    %v1233 = vpop.xlane.xlu0 %1232
    %v1234 = vmul.f32 %v1230, %v437
    %v1235 = vmul.f32 %v1233, %v437
    %v1236 = vmul.f32 %v1224, %v1224
    %v1237 = vmul.f32 %v1225, %v1225
    %v1238 = vsub.f32 %v1234, %v1236
    %v1239 = vsub.f32 %v1235, %v1237
    %v1240 = vsub.f32 %v1216, %v1224
    %v1241 = vsub.f32 %v1217, %v1225
    %v1242 = vadd.f32 %v1238, 1e-12
    %v1243 = vadd.f32 %v1239, 1e-12
    %v1244 = vrsqrt.pop %v1242
    %v1245 = vmul.f32 %v1244, %v1242
    %v1246 = vmul.f32 %v1245, %v1244
    %v1247 = vmul.f32 0.5, %v1246
    %v1248 = vsub.f32 1.5, %v1247
    %v1249 = vmul.f32 %v1244, %v1248
    %vm1250 = vweird.f32 %v1242
    %vm1251 = vweird.f32 %v1244
    %vm1252 = vmor %vm1250, %vm1251
    %v1253 = vsel %vm1252, %v1244, %v1249
    %v1254 = vrsqrt.pop %v1243
    %v1255 = vmul.f32 %v1254, %v1243
    %v1256 = vmul.f32 %v1255, %v1254
    %v1257 = vmul.f32 0.5, %v1256
    %v1258 = vsub.f32 1.5, %v1257
    %v1259 = vmul.f32 %v1254, %v1258
    %vm1260 = vweird.f32 %v1243
    %vm1261 = vweird.f32 %v1254
    %vm1262 = vmor %vm1260, %vm1261
    %v1263 = vsel %vm1262, %v1254, %v1259
    %v1264 = vmul.f32 %v1240, %v1253
    %v1265 = vmul.f32 %v1241, %v1263
    %v1267 = vperm.slane %v993, 0
    %v1269 = vmul.f32 %v1264, %v1267
    %v1270 = vmul.f32 %v1265, %v1267
    %v1272 = vperm.slane %v995, 0
    %v1274 = vadd.f32 %v1269, %v1272
    %v1275 = vadd.f32 %v1270, %v1272
    %v1276 = vpack.c.bf16 %v1274, %v1274
    %v1277 = vpack.c.bf16 %v1275, %v1275
    %v1279 = vperm.slane %v1002, 0
    %v1283 = vunpack.c.l.b16 %v1276
    %v1284 = vunpack.c.l.b16 %v1277
    %v1285 = vpack.c.b16 %v1284, %v1283
    %v1290 = vunpack.c.l.b16 %v997
    %v1291 = vunpack.c.l.b16 %v998
    %v1292 = vunpack.c.l.b16 %v999
    %v1293 = vunpack.c.l.b16 %v1000
    %v1294 = vpack.c.b16 %v1291, %v1290
    %v1295 = vpack.c.b16 %v1293, %v1292
    %v1299 = vsel %vm424, %v1285, 0
    %1301 = vmatpush.bf16.msra.mxu0 0
    %1302 = vmatpush.bf16.msra.mxu0 0
    %1303 = vmatpush.bf16.msra.mxu0 0
    %1304 = vmatpush.bf16.msra.mxu0 0
    %1305 = vmatpush.bf16.msra.mxu0 0
    %1306 = vmatpush.bf16.msra.mxu0 0
    %1307 = vmatpush.bf16.msra.mxu0 %v1295
    %1308 = vmatpush.bf16.msra.mxu0 %v1294
    %1309 = vmatmul.bf16.gmra.mxu0 %v1299
    %v1310 = vpop.f32.mrf.mxu0
    %v1311 = vadd.f32 %v1279, %v1310
    %v1312 = vpop.f32.mrf.mxu0
    %v1313 = vadd.f32 %v1279, %v1312
    %1314 = vdwg.mxu0
    %v1315 = vmul.f32 %v1311, 0.5
    %v1316 = vmul.f32 %v1313, 0.5
    %v1317 = vmul.f32 %v1311, 0.044715
    %v1318 = vmul.f32 %v1313, 0.044715
    %v1319 = vmul.f32 %v1317, %v1311
    %v1320 = vmul.f32 %v1318, %v1313
    %v1321 = vmul.f32 %v1319, %v1311
    %v1322 = vmul.f32 %v1320, %v1313
    %v1323 = vadd.f32 %v1311, %v1321
    %v1324 = vadd.f32 %v1313, %v1322
    %v1325 = vmul.f32 %v1323, 0.7978846
    %v1326 = vmul.f32 %v1324, 0.7978846
    %v1327 = vtanh.pop %v1325
    %v1328 = vtanh.pop %v1326
    %v1329 = vadd.f32 %v1327, 1.0
    %v1330 = vadd.f32 %v1328, 1.0
    %v1331 = vmul.f32 %v1315, %v1329
    %v1332 = vmul.f32 %v1316, %v1330
    %v1333 = vpack.c.bf16 %v1331, %v1331
    %v1334 = vpack.c.bf16 %v1332, %v1332
    %v1336 = vperm.slane %v1021, 0
    %v1340 = vunpack.c.l.b16 %v1333
    %v1341 = vunpack.c.l.b16 %v1334
    %v1342 = vpack.c.b16 %v1341, %v1340
    %v1360 = vunpack.c.l.b16 %v1004
    %v1361 = vunpack.c.l.b16 %v1005
    %v1362 = vunpack.c.l.b16 %v1006
    %v1363 = vunpack.c.l.b16 %v1007
    %v1364 = vunpack.c.l.b16 %v1008
    %v1365 = vunpack.c.l.b16 %v1009
    %v1366 = vunpack.c.l.b16 %v1010
    %v1367 = vunpack.c.l.b16 %v1011
    %v1368 = vunpack.c.l.b16 %v1012
    %v1369 = vunpack.c.l.b16 %v1013
    %v1370 = vunpack.c.l.b16 %v1014
    %v1371 = vunpack.c.l.b16 %v1015
    %v1372 = vunpack.c.l.b16 %v1016
    %v1373 = vunpack.c.l.b16 %v1017
    %v1374 = vunpack.c.l.b16 %v1018
    %v1375 = vunpack.c.l.b16 %v1019
    %v1376 = vpack.c.b16 %v1361, %v1360
    %v1377 = vpack.c.b16 %v1363, %v1362
    %v1378 = vpack.c.b16 %v1365, %v1364
    %v1379 = vpack.c.b16 %v1367, %v1366
    %v1380 = vpack.c.b16 %v1369, %v1368
    %v1381 = vpack.c.b16 %v1371, %v1370
    %v1382 = vpack.c.b16 %v1373, %v1372
    %v1383 = vpack.c.b16 %v1375, %v1374
    %1392 = vmatpush.bf16.msra.mxu0 %v1383
    %1393 = vmatpush.bf16.msra.mxu0 %v1382
    %1394 = vmatpush.bf16.msra.mxu0 %v1381
    %1395 = vmatpush.bf16.msra.mxu0 %v1380
    %1396 = vmatpush.bf16.msra.mxu0 %v1379
    %1397 = vmatpush.bf16.msra.mxu0 %v1378
    %1398 = vmatpush.bf16.msra.mxu0 %v1377
    %1399 = vmatpush.bf16.msra.mxu0 %v1376
    %1400 = vmatmul.bf16.gmra.mxu0 %v1342
    %v1401 = vpop.f32.mrf.mxu0
    %v1402 = vadd.f32 %v1336, %v1401
    %v1403 = vpop.f32.mrf.mxu0
    %v1404 = vadd.f32 %v1336, %v1403
    %1405 = vdwg.mxu0
    %v1406 = vadd.f32 %v1274, %v1402
    %v1407 = vadd.f32 %v1275, %v1404
    %v1408 = vsel %vm424, %v1406, 0.0
    %1409 = vadd.xlane.f32.xlu0 %v1408
    %v1410 = vpop.xlane.xlu0 %1409
    %v1411 = vsel %vm424, %v1407, 0.0
    %1412 = vadd.xlane.f32.xlu0 %v1411
    %v1413 = vpop.xlane.xlu0 %1412
    %v1414 = vmul.f32 %v1410, %v437
    %v1415 = vmul.f32 %v1413, %v437
    %v1416 = vmul.f32 %v1406, %v1406
    %v1417 = vmul.f32 %v1407, %v1407
    %v1418 = vsel %vm424, %v1416, 0.0
    %1419 = vadd.xlane.f32.xlu0 %v1418
    %v1420 = vpop.xlane.xlu0 %1419
    %v1421 = vsel %vm424, %v1417, 0.0
    %1422 = vadd.xlane.f32.xlu0 %v1421
    %v1423 = vpop.xlane.xlu0 %1422
    %v1424 = vmul.f32 %v1420, %v437
    %v1425 = vmul.f32 %v1423, %v437
    %v1426 = vmul.f32 %v1414, %v1414
    %v1427 = vmul.f32 %v1415, %v1415
    %v1428 = vsub.f32 %v1424, %v1426
    %v1429 = vsub.f32 %v1425, %v1427
    %v1430 = vsub.f32 %v1406, %v1414
    %v1431 = vsub.f32 %v1407, %v1415
    %v1432 = vadd.f32 %v1428, 1e-12
    %v1433 = vadd.f32 %v1429, 1e-12
    %v1434 = vrsqrt.pop %v1432
    %v1435 = vmul.f32 %v1434, %v1432
    %v1436 = vmul.f32 %v1435, %v1434
    %v1437 = vmul.f32 0.5, %v1436
    %v1438 = vsub.f32 1.5, %v1437
    %v1439 = vmul.f32 %v1434, %v1438
    %vm1440 = vweird.f32 %v1432
    %vm1441 = vweird.f32 %v1434
    %vm1442 = vmor %vm1440, %vm1441
    %v1443 = vsel %vm1442, %v1434, %v1439
    %v1444 = vrsqrt.pop %v1433
    %v1445 = vmul.f32 %v1444, %v1433
    %v1446 = vmul.f32 %v1445, %v1444
    %v1447 = vmul.f32 0.5, %v1446
    %v1448 = vsub.f32 1.5, %v1447
    %v1449 = vmul.f32 %v1444, %v1448
    %vm1450 = vweird.f32 %v1433
    %vm1451 = vweird.f32 %v1444
    %vm1452 = vmor %vm1450, %vm1451
    %v1453 = vsel %vm1452, %v1444, %v1449
    %v1454 = vmul.f32 %v1430, %v1443
    %v1455 = vmul.f32 %v1431, %v1453
    %v1457 = vperm.slane %v1023, 0
    %v1459 = vmul.f32 %v1454, %v1457
    %v1460 = vmul.f32 %v1455, %v1457
    %v1462 = vperm.slane %v1025, 0
    %v1464 = vadd.f32 %v1459, %v1462
    %v1465 = vadd.f32 %v1460, %v1462
    %v1466 = vld [vmem:[%s19] sm:$0xf]
    %v1467 = vld [vmem:[%s19 + $0x4] sm:$0xf]
    %v1468 = vld [vmem:[%s19 + $0x8] sm:$0xf]
    %v1469 = vld [vmem:[%s19 + $0xc] sm:$0xf]
    %v1470 = vpack.c.bf16 %v1464, %v1464
    %v1471 = vpack.c.bf16 %v1465, %v1465
    %v1472 = vld [vmem:[#allocation28] sm:$0x1]
    %v1474 = vperm.slane %v1472, 0
    %v1478 = vunpack.c.l.b16 %v1470
    %v1479 = vunpack.c.l.b16 %v1471
    %v1480 = vrot.slane %v1479, 7
    %vm1481 = vcmask 1041409
    %v1482 = vsel %vm1481, %v1480, %v1478
    %v1483 = vpack.c.b16 %v1482, %v1482
    %v1488 = vunpack.c.l.b16 %v1466
    %v1489 = vunpack.c.l.b16 %v1467
    %v1490 = vunpack.c.l.b16 %v1468
    %v1491 = vunpack.c.l.b16 %v1469
    %v1492 = vpack.c.b16 %v1489, %v1488
    %v1493 = vpack.c.b16 %v1491, %v1490
    %v1497 = vsel %vm424, %v1483, 0
    %1499 = vmatpush.bf16.msra.mxu0 0
    %1500 = vmatpush.bf16.msra.mxu0 0
    %1501 = vmatpush.bf16.msra.mxu0 0
    %1502 = vmatpush.bf16.msra.mxu0 0
    %1503 = vmatpush.bf16.msra.mxu0 0
    %1504 = vmatpush.bf16.msra.mxu0 0
    %1505 = vmatpush.bf16.msra.mxu0 %v1493
    %1506 = vmatpush.bf16.msra.mxu0 %v1492
    %1507 = vmatmul.bf16.gmra.mxu0 %v1497
    %v1508 = vpop.f32.mrf.mxu0
    %v1509 = vadd.f32 %v1474, %v1508
    %v1510 = vpop.f32.mrf.mxu0
    %1511 = vdwg.mxu0
    %v1512 = vtanh.pop %v1509
    %v1513 = vld [vmem:[%s21] sm:$0xff]
    %v1514 = vld [vmem:[%s21 + $0x8] sm:$0xff]
    %v1515 = vld [vmem:[%s21 + $0x10] sm:$0xff]
    %v1516 = vld [vmem:[%s21 + $0x18] sm:$0xff]
    %v1517 = vld [vmem:[%s21 + $0x20] sm:$0xff]
    %v1518 = vld [vmem:[%s21 + $0x28] sm:$0xff]
    %v1519 = vld [vmem:[%s21 + $0x30] sm:$0xff]
    %v1520 = vld [vmem:[%s21 + $0x38] sm:$0xff]
    %v1521 = vpack.c.bf16 %v1512, %v1512
    %v1522 = vld [vmem:[%s22] sm:$0xf]
    %v1524 = vperm.slane %v1522, 0
    %v1525 = vperm.slane %v1522, 1
    %v1526 = vperm.slane %v1522, 2
    %v1527 = vperm.slane %v1522, 3
    %v1540 = vunpack.c.l.b16 %v1513
    %v1541 = vunpack.c.h.b16 %v1513
    %v1542 = vunpack.c.l.b16 %v1514
    %v1543 = vunpack.c.h.b16 %v1514
    %v1544 = vunpack.c.l.b16 %v1515
    %v1545 = vunpack.c.h.b16 %v1515
    %v1546 = vunpack.c.l.b16 %v1516
    %v1547 = vunpack.c.h.b16 %v1516
    %v1548 = vunpack.c.l.b16 %v1517
    %v1549 = vunpack.c.h.b16 %v1517
    %v1550 = vunpack.c.l.b16 %v1518
    %v1551 = vunpack.c.h.b16 %v1518
    %v1552 = vunpack.c.l.b16 %v1519
    %v1553 = vunpack.c.h.b16 %v1519
    %v1554 = vunpack.c.l.b16 %v1520
    %v1555 = vunpack.c.h.b16 %v1520
    %v1556 = vpack.c.b16 %v1544, %v1540
    %v1557 = vpack.c.b16 %v1545, %v1541
    %v1558 = vpack.c.b16 %v1546, %v1542
    %v1559 = vpack.c.b16 %v1547, %v1543
    %v1560 = vpack.c.b16 %v1552, %v1548
    %v1561 = vpack.c.b16 %v1553, %v1549
    %v1562 = vpack.c.b16 %v1554, %v1550
    %v1563 = vpack.c.b16 %v1555, %v1551
    %v1573 = vsel %vm424, %v1521, 0
    %1575 = vmatpush.bf16.msra.mxu0 0
    %1576 = vmatpush.bf16.msra.mxu0 0
    %1577 = vmatpush.bf16.msra.mxu0 0
    %1578 = vmatpush.bf16.msra.mxu0 0
    %1579 = vmatpush.bf16.msra.mxu0 0
    %1580 = vmatpush.bf16.msra.mxu0 0
    %1581 = vmatpush.bf16.msra.mxu0 %v1560
    %1582 = vmatpush.bf16.msra.mxu0 %v1556
    %1583 = vmatmul.bf16.gmra.mxu0 %v1573
    %v1584 = vpop.f32.mrf.mxu0
    %v1585 = vadd.f32 %v1524, %v1584
    %v1586 = vpop.f32.mrf.mxu0
    %1587 = vdwg.mxu0
    %1588 = vmatpush.bf16.msra.mxu0 0
    %1589 = vmatpush.bf16.msra.mxu0 0
    %1590 = vmatpush.bf16.msra.mxu0 0
    %1591 = vmatpush.bf16.msra.mxu0 0
    %1592 = vmatpush.bf16.msra.mxu0 0
    %1593 = vmatpush.bf16.msra.mxu0 0
    %1594 = vmatpush.bf16.msra.mxu0 %v1561
    %1595 = vmatpush.bf16.msra.mxu0 %v1557
    %1596 = vmatmul.bf16.gmra.mxu0 %v1573
    %v1597 = vpop.f32.mrf.mxu0
    %v1598 = vadd.f32 %v1525, %v1597
    %v1599 = vpop.f32.mrf.mxu0
    %1600 = vdwg.mxu0
    %1601 = vmatpush.bf16.msra.mxu0 0
    %1602 = vmatpush.bf16.msra.mxu0 0
    %1603 = vmatpush.bf16.msra.mxu0 0
    %1604 = vmatpush.bf16.msra.mxu0 0
    %1605 = vmatpush.bf16.msra.mxu0 0
    %1606 = vmatpush.bf16.msra.mxu0 0
    %1607 = vmatpush.bf16.msra.mxu0 %v1562
    %1608 = vmatpush.bf16.msra.mxu0 %v1558
    %1609 = vmatmul.bf16.gmra.mxu0 %v1573
    %v1610 = vpop.f32.mrf.mxu0
    %v1611 = vadd.f32 %v1526, %v1610
    %v1612 = vpop.f32.mrf.mxu0
    %1613 = vdwg.mxu0
    %1614 = vmatpush.bf16.msra.mxu0 0
    %1615 = vmatpush.bf16.msra.mxu0 0
    %1616 = vmatpush.bf16.msra.mxu0 0
    %1617 = vmatpush.bf16.msra.mxu0 0
    %1618 = vmatpush.bf16.msra.mxu0 0
    %1619 = vmatpush.bf16.msra.mxu0 0
    %1620 = vmatpush.bf16.msra.mxu0 %v1563
    %1621 = vmatpush.bf16.msra.mxu0 %v1559
    %1622 = vmatmul.bf16.gmra.mxu0 %v1573
    %v1623 = vpop.f32.mrf.mxu0
    %v1624 = vadd.f32 %v1527, %v1623
    %v1625 = vpop.f32.mrf.mxu0
    %1626 = vdwg.mxu0
    %v1627 = vmax.f32 %v1585, 0.0
    %v1628 = vmax.f32 %v1598, 0.0
    %v1629 = vmax.f32 %v1611, 0.0
    %v1630 = vmax.f32 %v1624, 0.0
    %v1631 = vld [vmem:[#allocation29] sm:$0xff]
    %v1632 = vld [vmem:[#allocation29 + $0x8] sm:$0xff]
    %v1633 = vld [vmem:[#allocation29 + $0x10] sm:$0xff]
    %v1634 = vld [vmem:[#allocation29 + $0x18] sm:$0xff]
    %v1635 = vld [vmem:[#allocation29 + $0x20] sm:$0xff]
    %v1636 = vld [vmem:[#allocation29 + $0x28] sm:$0xff]
    %v1637 = vld [vmem:[#allocation29 + $0x30] sm:$0xff]
    %v1638 = vld [vmem:[#allocation29 + $0x38] sm:$0xff]
    %v1639 = vld [vmem:[#allocation29 + $0x40] sm:$0xff]
    %v1640 = vld [vmem:[#allocation29 + $0x48] sm:$0xff]
    %v1641 = vld [vmem:[#allocation29 + $0x50] sm:$0xff]
    %v1642 = vld [vmem:[#allocation29 + $0x58] sm:$0xff]
    %v1643 = vld [vmem:[#allocation29 + $0x60] sm:$0xff]
    %v1644 = vld [vmem:[#allocation29 + $0x68] sm:$0xff]
    %v1645 = vld [vmem:[#allocation29 + $0x70] sm:$0xff]
    %v1646 = vld [vmem:[#allocation29 + $0x78] sm:$0xff]
    %v1647 = vld [vmem:[#allocation29 + $0x80] sm:$0xff]
    %v1648 = vld [vmem:[#allocation29 + $0x88] sm:$0xff]
    %v1649 = vld [vmem:[#allocation29 + $0x90] sm:$0xff]
    %v1650 = vld [vmem:[#allocation29 + $0x98] sm:$0xff]
    %v1651 = vld [vmem:[#allocation29 + $0xa0] sm:$0xff]
    %v1652 = vld [vmem:[#allocation29 + $0xa8] sm:$0xff]
    %v1653 = vld [vmem:[#allocation29 + $0xb0] sm:$0xff]
    %v1654 = vld [vmem:[#allocation29 + $0xb8] sm:$0xff]
    %v1655 = vld [vmem:[#allocation29 + $0xc0] sm:$0xff]
    %v1656 = vld [vmem:[#allocation29 + $0xc8] sm:$0xff]
    %v1657 = vld [vmem:[#allocation29 + $0xd0] sm:$0xff]
    %v1658 = vld [vmem:[#allocation29 + $0xd8] sm:$0xff]
    %v1659 = vld [vmem:[#allocation29 + $0xe0] sm:$0xff]
    %v1660 = vld [vmem:[#allocation29 + $0xe8] sm:$0xff]
    %v1661 = vld [vmem:[#allocation29 + $0xf0] sm:$0xff]
    %v1662 = vld [vmem:[#allocation29 + $0xf8] sm:$0xff]
    %v1663 = vld [vmem:[#allocation29 + $0x100] sm:$0xff]
    %v1664 = vld [vmem:[#allocation29 + $0x108] sm:$0xff]
    %v1665 = vld [vmem:[#allocation29 + $0x110] sm:$0xff]
    %v1666 = vld [vmem:[#allocation29 + $0x118] sm:$0xff]
    %v1667 = vld [vmem:[#allocation29 + $0x120] sm:$0xff]
    %v1668 = vld [vmem:[#allocation29 + $0x128] sm:$0xff]
    %v1669 = vld [vmem:[#allocation29 + $0x130] sm:$0xff]
    %v1670 = vld [vmem:[#allocation29 + $0x138] sm:$0xff]
    %v1671 = vld [vmem:[#allocation29 + $0x140] sm:$0xff]
    %v1672 = vld [vmem:[#allocation29 + $0x148] sm:$0xff]
    %v1673 = vld [vmem:[#allocation29 + $0x150] sm:$0xff]
    %v1674 = vld [vmem:[#allocation29 + $0x158] sm:$0xff]
    %v1675 = vld [vmem:[#allocation29 + $0x160] sm:$0xff]
    %v1676 = vld [vmem:[#allocation29 + $0x168] sm:$0xff]
    %v1677 = vld [vmem:[#allocation29 + $0x170] sm:$0xff]
    %v1678 = vld [vmem:[#allocation29 + $0x178] sm:$0xff]
    %v1679 = vld [vmem:[#allocation29 + $0x180] sm:$0xff]
    %v1680 = vld [vmem:[#allocation29 + $0x188] sm:$0xff]
    %v1681 = vld [vmem:[#allocation29 + $0x190] sm:$0xff]
    %v1682 = vld [vmem:[#allocation29 + $0x198] sm:$0xff]
    %v1683 = vld [vmem:[#allocation29 + $0x1a0] sm:$0xff]
    %v1684 = vld [vmem:[#allocation29 + $0x1a8] sm:$0xff]
    %v1685 = vld [vmem:[#allocation29 + $0x1b0] sm:$0xff]
    %v1686 = vld [vmem:[#allocation29 + $0x1b8] sm:$0xff]
    %v1687 = vld [vmem:[#allocation29 + $0x1c0] sm:$0xff]
    %v1688 = vld [vmem:[#allocation29 + $0x1c8] sm:$0xff]
    %v1689 = vld [vmem:[#allocation29 + $0x1d0] sm:$0xff]
    %v1690 = vld [vmem:[#allocation29 + $0x1d8] sm:$0xff]
    %v1691 = vld [vmem:[#allocation29 + $0x1e0] sm:$0xff]
    %v1692 = vld [vmem:[#allocation29 + $0x1e8] sm:$0xff]
    %v1693 = vld [vmem:[#allocation29 + $0x1f0] sm:$0xff]
    %v1694 = vld [vmem:[#allocation29 + $0x1f8] sm:$0xff]
    %v1695 = vpack.c.bf16 %v1627, %v1627
    %v1696 = vpack.c.bf16 %v1628, %v1628
    %v1697 = vpack.c.bf16 %v1629, %v1629
    %v1698 = vpack.c.bf16 %v1630, %v1630
    %v1699 = vld [vmem:[%s24] sm:$0x3]
    %v1701 = vperm.slane %v1699, 0
    %v1702 = vperm.slane %v1699, 1
    %v1769 = vunpack.c.l.b16 %v1631
    %v1770 = vunpack.c.h.b16 %v1631
    %v1771 = vunpack.c.l.b16 %v1632
    %v1772 = vunpack.c.h.b16 %v1632
    %v1773 = vunpack.c.l.b16 %v1633
    %v1774 = vunpack.c.h.b16 %v1633
    %v1775 = vunpack.c.l.b16 %v1634
    %v1776 = vunpack.c.h.b16 %v1634
    %v1777 = vunpack.c.l.b16 %v1635
    %v1778 = vunpack.c.h.b16 %v1635
    %v1779 = vunpack.c.l.b16 %v1636
    %v1780 = vunpack.c.h.b16 %v1636
    %v1781 = vunpack.c.l.b16 %v1637
    %v1782 = vunpack.c.h.b16 %v1637
    %v1783 = vunpack.c.l.b16 %v1638
    %v1784 = vunpack.c.h.b16 %v1638
    %v1785 = vunpack.c.l.b16 %v1639
    %v1786 = vunpack.c.h.b16 %v1639
    %v1787 = vunpack.c.l.b16 %v1640
    %v1788 = vunpack.c.h.b16 %v1640
    %v1789 = vunpack.c.l.b16 %v1641
    %v1790 = vunpack.c.h.b16 %v1641
    %v1791 = vunpack.c.l.b16 %v1642
    %v1792 = vunpack.c.h.b16 %v1642
    %v1793 = vunpack.c.l.b16 %v1643
    %v1794 = vunpack.c.h.b16 %v1643
    %v1795 = vunpack.c.l.b16 %v1644
    %v1796 = vunpack.c.h.b16 %v1644
    %v1797 = vunpack.c.l.b16 %v1645
    %v1798 = vunpack.c.h.b16 %v1645
    %v1799 = vunpack.c.l.b16 %v1646
    %v1800 = vunpack.c.h.b16 %v1646
    %v1801 = vunpack.c.l.b16 %v1647
    %v1802 = vunpack.c.h.b16 %v1647
    %v1803 = vunpack.c.l.b16 %v1648
    %v1804 = vunpack.c.h.b16 %v1648
    %v1805 = vunpack.c.l.b16 %v1649
    %v1806 = vunpack.c.h.b16 %v1649
    %v1807 = vunpack.c.l.b16 %v1650
    %v1808 = vunpack.c.h.b16 %v1650
    %v1809 = vunpack.c.l.b16 %v1651
    %v1810 = vunpack.c.h.b16 %v1651
    %v1811 = vunpack.c.l.b16 %v1652
    %v1812 = vunpack.c.h.b16 %v1652
    %v1813 = vunpack.c.l.b16 %v1653
    %v1814 = vunpack.c.h.b16 %v1653
    %v1815 = vunpack.c.l.b16 %v1654
    %v1816 = vunpack.c.h.b16 %v1654
    %v1817 = vunpack.c.l.b16 %v1655
    %v1818 = vunpack.c.h.b16 %v1655
    %v1819 = vunpack.c.l.b16 %v1656
    %v1820 = vunpack.c.h.b16 %v1656
    %v1821 = vunpack.c.l.b16 %v1657
    %v1822 = vunpack.c.h.b16 %v1657
    %v1823 = vunpack.c.l.b16 %v1658
    %v1824 = vunpack.c.h.b16 %v1658
    %v1825 = vunpack.c.l.b16 %v1659
    %v1826 = vunpack.c.h.b16 %v1659
    %v1827 = vunpack.c.l.b16 %v1660
    %v1828 = vunpack.c.h.b16 %v1660
    %v1829 = vunpack.c.l.b16 %v1661
    %v1830 = vunpack.c.h.b16 %v1661
    %v1831 = vunpack.c.l.b16 %v1662
    %v1832 = vunpack.c.h.b16 %v1662
    %v1833 = vunpack.c.l.b16 %v1663
    %v1834 = vunpack.c.h.b16 %v1663
    %v1835 = vunpack.c.l.b16 %v1664
    %v1836 = vunpack.c.h.b16 %v1664
    %v1837 = vunpack.c.l.b16 %v1665
    %v1838 = vunpack.c.h.b16 %v1665
    %v1839 = vunpack.c.l.b16 %v1666
    %v1840 = vunpack.c.h.b16 %v1666
    %v1841 = vunpack.c.l.b16 %v1667
    %v1842 = vunpack.c.h.b16 %v1667
    %v1843 = vunpack.c.l.b16 %v1668
    %v1844 = vunpack.c.h.b16 %v1668
    %v1845 = vunpack.c.l.b16 %v1669
    %v1846 = vunpack.c.h.b16 %v1669
    %v1847 = vunpack.c.l.b16 %v1670
    %v1848 = vunpack.c.h.b16 %v1670
    %v1849 = vunpack.c.l.b16 %v1671
    %v1850 = vunpack.c.h.b16 %v1671
    %v1851 = vunpack.c.l.b16 %v1672
    %v1852 = vunpack.c.h.b16 %v1672
    %v1853 = vunpack.c.l.b16 %v1673
    %v1854 = vunpack.c.h.b16 %v1673
    %v1855 = vunpack.c.l.b16 %v1674
    %v1856 = vunpack.c.h.b16 %v1674
    %v1857 = vunpack.c.l.b16 %v1675
    %v1858 = vunpack.c.h.b16 %v1675
    %v1859 = vunpack.c.l.b16 %v1676
    %v1860 = vunpack.c.h.b16 %v1676
    %v1861 = vunpack.c.l.b16 %v1677
    %v1862 = vunpack.c.h.b16 %v1677
    %v1863 = vunpack.c.l.b16 %v1678
    %v1864 = vunpack.c.h.b16 %v1678
    %v1865 = vunpack.c.l.b16 %v1679
    %v1866 = vunpack.c.h.b16 %v1679
    %v1867 = vunpack.c.l.b16 %v1680
    %v1868 = vunpack.c.h.b16 %v1680
    %v1869 = vunpack.c.l.b16 %v1681
    %v1870 = vunpack.c.h.b16 %v1681
    %v1871 = vunpack.c.l.b16 %v1682
    %v1872 = vunpack.c.h.b16 %v1682
    %v1873 = vunpack.c.l.b16 %v1683
    %v1874 = vunpack.c.h.b16 %v1683
    %v1875 = vunpack.c.l.b16 %v1684
    %v1876 = vunpack.c.h.b16 %v1684
    %v1877 = vunpack.c.l.b16 %v1685
    %v1878 = vunpack.c.h.b16 %v1685
    %v1879 = vunpack.c.l.b16 %v1686
    %v1880 = vunpack.c.h.b16 %v1686
    %v1881 = vunpack.c.l.b16 %v1687
    %v1882 = vunpack.c.h.b16 %v1687
    %v1883 = vunpack.c.l.b16 %v1688
    %v1884 = vunpack.c.h.b16 %v1688
    %v1885 = vunpack.c.l.b16 %v1689
    %v1886 = vunpack.c.h.b16 %v1689
    %v1887 = vunpack.c.l.b16 %v1690
    %v1888 = vunpack.c.h.b16 %v1690
    %v1889 = vunpack.c.l.b16 %v1691
    %v1890 = vunpack.c.h.b16 %v1691
    %v1891 = vunpack.c.l.b16 %v1692
    %v1892 = vunpack.c.h.b16 %v1692
    %v1893 = vunpack.c.l.b16 %v1693
    %v1894 = vunpack.c.h.b16 %v1693
    %v1895 = vunpack.c.l.b16 %v1694
    %v1896 = vunpack.c.h.b16 %v1694
    %v1897 = vpack.c.b16 %v1771, %v1769
    %v1898 = vpack.c.b16 %v1772, %v1770
    %v1899 = vpack.c.b16 %v1775, %v1773
    %v1900 = vpack.c.b16 %v1776, %v1774
    %v1901 = vpack.c.b16 %v1779, %v1777
    %v1902 = vpack.c.b16 %v1780, %v1778
    %v1903 = vpack.c.b16 %v1783, %v1781
    %v1904 = vpack.c.b16 %v1784, %v1782
    %v1905 = vpack.c.b16 %v1787, %v1785
    %v1906 = vpack.c.b16 %v1788, %v1786
    %v1907 = vpack.c.b16 %v1791, %v1789
    %v1908 = vpack.c.b16 %v1792, %v1790
    %v1909 = vpack.c.b16 %v1795, %v1793
    %v1910 = vpack.c.b16 %v1796, %v1794
    %v1911 = vpack.c.b16 %v1799, %v1797
    %v1912 = vpack.c.b16 %v1800, %v1798
    %v1913 = vpack.c.b16 %v1803, %v1801
    %v1914 = vpack.c.b16 %v1804, %v1802
    %v1915 = vpack.c.b16 %v1807, %v1805
    %v1916 = vpack.c.b16 %v1808, %v1806
    %v1917 = vpack.c.b16 %v1811, %v1809
    %v1918 = vpack.c.b16 %v1812, %v1810
    %v1919 = vpack.c.b16 %v1815, %v1813
    %v1920 = vpack.c.b16 %v1816, %v1814
    %v1921 = vpack.c.b16 %v1819, %v1817
    %v1922 = vpack.c.b16 %v1820, %v1818
    %v1923 = vpack.c.b16 %v1823, %v1821
    %v1924 = vpack.c.b16 %v1824, %v1822
    %v1925 = vpack.c.b16 %v1827, %v1825
    %v1926 = vpack.c.b16 %v1828, %v1826
    %v1927 = vpack.c.b16 %v1831, %v1829
    %v1928 = vpack.c.b16 %v1832, %v1830
    %v1929 = vpack.c.b16 %v1835, %v1833
    %v1930 = vpack.c.b16 %v1836, %v1834
    %v1931 = vpack.c.b16 %v1839, %v1837
    %v1932 = vpack.c.b16 %v1840, %v1838
    %v1933 = vpack.c.b16 %v1843, %v1841
    %v1934 = vpack.c.b16 %v1844, %v1842
    %v1935 = vpack.c.b16 %v1847, %v1845
    %v1936 = vpack.c.b16 %v1848, %v1846
    %v1937 = vpack.c.b16 %v1851, %v1849
    %v1938 = vpack.c.b16 %v1852, %v1850
    %v1939 = vpack.c.b16 %v1855, %v1853
    %v1940 = vpack.c.b16 %v1856, %v1854
    %v1941 = vpack.c.b16 %v1859, %v1857
    %v1942 = vpack.c.b16 %v1860, %v1858
    %v1943 = vpack.c.b16 %v1863, %v1861
    %v1944 = vpack.c.b16 %v1864, %v1862
    %v1945 = vpack.c.b16 %v1867, %v1865
    %v1946 = vpack.c.b16 %v1868, %v1866
    %v1947 = vpack.c.b16 %v1871, %v1869
    %v1948 = vpack.c.b16 %v1872, %v1870
    %v1949 = vpack.c.b16 %v1875, %v1873
    %v1950 = vpack.c.b16 %v1876, %v1874
    %v1951 = vpack.c.b16 %v1879, %v1877
    %v1952 = vpack.c.b16 %v1880, %v1878
    %v1953 = vpack.c.b16 %v1883, %v1881
    %v1954 = vpack.c.b16 %v1884, %v1882
    %v1955 = vpack.c.b16 %v1887, %v1885
    %v1956 = vpack.c.b16 %v1888, %v1886
    %v1957 = vpack.c.b16 %v1891, %v1889
    %v1958 = vpack.c.b16 %v1892, %v1890
    %v1959 = vpack.c.b16 %v1895, %v1893
    %v1960 = vpack.c.b16 %v1896, %v1894
    %2025 = vmatpush.bf16.msra.mxu0 %v1911
    %2026 = vmatpush.bf16.msra.mxu0 %v1909
    %2027 = vmatpush.bf16.msra.mxu0 %v1907
    %2028 = vmatpush.bf16.msra.mxu0 %v1905
    %2029 = vmatpush.bf16.msra.mxu0 %v1903
    %2030 = vmatpush.bf16.msra.mxu0 %v1901
    %2031 = vmatpush.bf16.msra.mxu0 %v1899
    %2032 = vmatpush.bf16.msra.mxu0 %v1897
    %2033 = vmatmul.bf16.gmra.mxu0 %v1695
    %v2034 = vpop.f32.mrf.mxu0
    %v2035 = vadd.f32 %v1701, %v2034
    %v2036 = vpop.f32.mrf.mxu0
    %2037 = vdwg.mxu0
    %2038 = vmatpush.bf16.msra.mxu0 %v1927
    %2039 = vmatpush.bf16.msra.mxu0 %v1925
    %2040 = vmatpush.bf16.msra.mxu0 %v1923
    %2041 = vmatpush.bf16.msra.mxu0 %v1921
    %2042 = vmatpush.bf16.msra.mxu0 %v1919
    %2043 = vmatpush.bf16.msra.mxu0 %v1917
    %2044 = vmatpush.bf16.msra.mxu0 %v1915
    %2045 = vmatpush.bf16.msra.mxu0 %v1913
    %2046 = vmatmul.bf16.gmra.mxu0 %v1696
    %v2047 = vpop.f32.mrf.mxu0
    %v2048 = vadd.f32 %v2035, %v2047
    %v2049 = vpop.f32.mrf.mxu0
    %2050 = vdwg.mxu0
    %2051 = vmatpush.bf16.msra.mxu0 %v1943
    %2052 = vmatpush.bf16.msra.mxu0 %v1941
    %2053 = vmatpush.bf16.msra.mxu0 %v1939
    %2054 = vmatpush.bf16.msra.mxu0 %v1937
    %2055 = vmatpush.bf16.msra.mxu0 %v1935
    %2056 = vmatpush.bf16.msra.mxu0 %v1933
    %2057 = vmatpush.bf16.msra.mxu0 %v1931
    %2058 = vmatpush.bf16.msra.mxu0 %v1929
    %2059 = vmatmul.bf16.gmra.mxu0 %v1697
    %v2060 = vpop.f32.mrf.mxu0
    %v2061 = vadd.f32 %v2048, %v2060
    %v2062 = vpop.f32.mrf.mxu0
    %2063 = vdwg.mxu0
    %2064 = vmatpush.bf16.msra.mxu0 %v1959
    %2065 = vmatpush.bf16.msra.mxu0 %v1957
    %2066 = vmatpush.bf16.msra.mxu0 %v1955
    %2067 = vmatpush.bf16.msra.mxu0 %v1953
    %2068 = vmatpush.bf16.msra.mxu0 %v1951
    %2069 = vmatpush.bf16.msra.mxu0 %v1949
    %2070 = vmatpush.bf16.msra.mxu0 %v1947
    %2071 = vmatpush.bf16.msra.mxu0 %v1945
    %2072 = vmatmul.bf16.gmra.mxu0 %v1698
    %v2073 = vpop.f32.mrf.mxu0
    %v2074 = vadd.f32 %v2061, %v2073
    %v2075 = vpop.f32.mrf.mxu0
    %2076 = vdwg.mxu0
    %2077 = vmatpush.bf16.msra.mxu0 %v1912
    %2078 = vmatpush.bf16.msra.mxu0 %v1910
    %2079 = vmatpush.bf16.msra.mxu0 %v1908
    %2080 = vmatpush.bf16.msra.mxu0 %v1906
    %2081 = vmatpush.bf16.msra.mxu0 %v1904
    %2082 = vmatpush.bf16.msra.mxu0 %v1902
    %2083 = vmatpush.bf16.msra.mxu0 %v1900
    %2084 = vmatpush.bf16.msra.mxu0 %v1898
    %2085 = vmatmul.bf16.gmra.mxu0 %v1695
    %v2086 = vpop.f32.mrf.mxu0
    %v2087 = vadd.f32 %v1702, %v2086
    %v2088 = vpop.f32.mrf.mxu0
    %2089 = vdwg.mxu0
    %2090 = vmatpush.bf16.msra.mxu0 %v1928
    %2091 = vmatpush.bf16.msra.mxu0 %v1926
    %2092 = vmatpush.bf16.msra.mxu0 %v1924
    %2093 = vmatpush.bf16.msra.mxu0 %v1922
    %2094 = vmatpush.bf16.msra.mxu0 %v1920
    %2095 = vmatpush.bf16.msra.mxu0 %v1918
    %2096 = vmatpush.bf16.msra.mxu0 %v1916
    %2097 = vmatpush.bf16.msra.mxu0 %v1914
    %2098 = vmatmul.bf16.gmra.mxu0 %v1696
    %v2099 = vpop.f32.mrf.mxu0
    %v2100 = vadd.f32 %v2087, %v2099
    %v2101 = vpop.f32.mrf.mxu0
    %2102 = vdwg.mxu0
    %2103 = vmatpush.bf16.msra.mxu0 %v1944
    %2104 = vmatpush.bf16.msra.mxu0 %v1942
    %2105 = vmatpush.bf16.msra.mxu0 %v1940
    %2106 = vmatpush.bf16.msra.mxu0 %v1938
    %2107 = vmatpush.bf16.msra.mxu0 %v1936
    %2108 = vmatpush.bf16.msra.mxu0 %v1934
    %2109 = vmatpush.bf16.msra.mxu0 %v1932
    %2110 = vmatpush.bf16.msra.mxu0 %v1930
    %2111 = vmatmul.bf16.gmra.mxu0 %v1697
    %v2112 = vpop.f32.mrf.mxu0
    %v2113 = vadd.f32 %v2100, %v2112
    %v2114 = vpop.f32.mrf.mxu0
    %2115 = vdwg.mxu0
    %2116 = vmatpush.bf16.msra.mxu0 %v1960
    %2117 = vmatpush.bf16.msra.mxu0 %v1958
    %2118 = vmatpush.bf16.msra.mxu0 %v1956
    %2119 = vmatpush.bf16.msra.mxu0 %v1954
    %2120 = vmatpush.bf16.msra.mxu0 %v1952
    %2121 = vmatpush.bf16.msra.mxu0 %v1950
    %2122 = vmatpush.bf16.msra.mxu0 %v1948
    %2123 = vmatpush.bf16.msra.mxu0 %v1946
    %2124 = vmatmul.bf16.gmra.mxu0 %v1698
    %v2125 = vpop.f32.mrf.mxu0
    %v2126 = vadd.f32 %v2113, %v2125
    %v2127 = vpop.f32.mrf.mxu0
    %2128 = vdwg.mxu0
    %v2129 = vmax.f32 %v2074, 0.0
    %v2130 = vmax.f32 %v2126, 0.0
    %v2131 = vld [vmem:[%s25] sm:$0xf]
    %v2132 = vld [vmem:[%s25 + $0x4] sm:$0xf]
    %v2133 = vld [vmem:[%s25 + $0x8] sm:$0xf]
    %v2134 = vld [vmem:[%s25 + $0xc] sm:$0xf]
    %v2135 = vld [vmem:[%s25 + $0x10] sm:$0xf]
    %v2136 = vld [vmem:[%s25 + $0x14] sm:$0xf]
    %v2137 = vld [vmem:[%s25 + $0x18] sm:$0xf]
    %v2138 = vld [vmem:[%s25 + $0x1c] sm:$0xf]
    %v2139 = vld [vmem:[%s25 + $0x20] sm:$0xf]
    %v2140 = vld [vmem:[%s25 + $0x24] sm:$0xf]
    %v2141 = vld [vmem:[%s25 + $0x28] sm:$0xf]
    %v2142 = vld [vmem:[%s25 + $0x2c] sm:$0xf]
    %v2143 = vld [vmem:[%s25 + $0x30] sm:$0xf]
    %v2144 = vld [vmem:[%s25 + $0x34] sm:$0xf]
    %v2145 = vld [vmem:[%s25 + $0x38] sm:$0xf]
    %v2146 = vld [vmem:[%s25 + $0x3c] sm:$0xf]
    %v2147 = vld [vmem:[%s25 + $0x40] sm:$0xf]
    %v2148 = vld [vmem:[%s25 + $0x44] sm:$0xf]
    %v2149 = vld [vmem:[%s25 + $0x48] sm:$0xf]
    %v2150 = vld [vmem:[%s25 + $0x4c] sm:$0xf]
    %v2151 = vld [vmem:[%s25 + $0x50] sm:$0xf]
    %v2152 = vld [vmem:[%s25 + $0x54] sm:$0xf]
    %v2153 = vld [vmem:[%s25 + $0x58] sm:$0xf]
    %v2154 = vld [vmem:[%s25 + $0x5c] sm:$0xf]
    %v2155 = vld [vmem:[%s25 + $0x60] sm:$0xf]
    %v2156 = vld [vmem:[%s25 + $0x64] sm:$0xf]
    %v2157 = vld [vmem:[%s25 + $0x68] sm:$0xf]
    %v2158 = vld [vmem:[%s25 + $0x6c] sm:$0xf]
    %v2159 = vld [vmem:[%s25 + $0x70] sm:$0xf]
    %v2160 = vld [vmem:[%s25 + $0x74] sm:$0xf]
    %v2161 = vld [vmem:[%s25 + $0x78] sm:$0xf]
    %v2162 = vld [vmem:[%s25 + $0x7c] sm:$0xf]
    %v2163 = vpack.c.bf16 %v2129, %v2129
    %v2164 = vpack.c.bf16 %v2130, %v2130
    %v2165 = vld [vmem:[%s26] sm:$0x1]
    %v2167 = vperm.slane %v2165, 0
    %v2201 = vunpack.c.l.b16 %v2131
    %v2202 = vunpack.c.l.b16 %v2132
    %v2203 = vunpack.c.l.b16 %v2133
    %v2204 = vunpack.c.l.b16 %v2134
    %v2205 = vunpack.c.l.b16 %v2135
    %v2206 = vunpack.c.l.b16 %v2136
    %v2207 = vunpack.c.l.b16 %v2137
    %v2208 = vunpack.c.l.b16 %v2138
    %v2209 = vunpack.c.l.b16 %v2139
    %v2210 = vunpack.c.l.b16 %v2140
    %v2211 = vunpack.c.l.b16 %v2141
    %v2212 = vunpack.c.l.b16 %v2142
    %v2213 = vunpack.c.l.b16 %v2143
    %v2214 = vunpack.c.l.b16 %v2144
    %v2215 = vunpack.c.l.b16 %v2145
    %v2216 = vunpack.c.l.b16 %v2146
    %v2217 = vunpack.c.l.b16 %v2147
    %v2218 = vunpack.c.l.b16 %v2148
    %v2219 = vunpack.c.l.b16 %v2149
    %v2220 = vunpack.c.l.b16 %v2150
    %v2221 = vunpack.c.l.b16 %v2151
    %v2222 = vunpack.c.l.b16 %v2152
    %v2223 = vunpack.c.l.b16 %v2153
    %v2224 = vunpack.c.l.b16 %v2154
    %v2225 = vunpack.c.l.b16 %v2155
    %v2226 = vunpack.c.l.b16 %v2156
    %v2227 = vunpack.c.l.b16 %v2157
    %v2228 = vunpack.c.l.b16 %v2158
    %v2229 = vunpack.c.l.b16 %v2159
    %v2230 = vunpack.c.l.b16 %v2160
    %v2231 = vunpack.c.l.b16 %v2161
    %v2232 = vunpack.c.l.b16 %v2162
    %v2233 = vpack.c.b16 %v2202, %v2201
    %v2234 = vpack.c.b16 %v2204, %v2203
    %v2235 = vpack.c.b16 %v2206, %v2205
    %v2236 = vpack.c.b16 %v2208, %v2207
    %v2237 = vpack.c.b16 %v2210, %v2209
    %v2238 = vpack.c.b16 %v2212, %v2211
    %v2239 = vpack.c.b16 %v2214, %v2213
    %v2240 = vpack.c.b16 %v2216, %v2215
    %v2241 = vpack.c.b16 %v2218, %v2217
    %v2242 = vpack.c.b16 %v2220, %v2219
    %v2243 = vpack.c.b16 %v2222, %v2221
    %v2244 = vpack.c.b16 %v2224, %v2223
    %v2245 = vpack.c.b16 %v2226, %v2225
    %v2246 = vpack.c.b16 %v2228, %v2227
    %v2247 = vpack.c.b16 %v2230, %v2229
    %v2248 = vpack.c.b16 %v2232, %v2231
    %2265 = vmatpush.bf16.msra.mxu0 %v2240
    %2266 = vmatpush.bf16.msra.mxu0 %v2239
    %2267 = vmatpush.bf16.msra.mxu0 %v2238
    %2268 = vmatpush.bf16.msra.mxu0 %v2237
    %2269 = vmatpush.bf16.msra.mxu0 %v2236
    %2270 = vmatpush.bf16.msra.mxu0 %v2235
    %2271 = vmatpush.bf16.msra.mxu0 %v2234
    %2272 = vmatpush.bf16.msra.mxu0 %v2233
    %2273 = vmatmul.bf16.gmra.mxu0 %v2163
    %v2274 = vpop.f32.mrf.mxu0
    %v2275 = vadd.f32 %v2167, %v2274
    %v2276 = vpop.f32.mrf.mxu0
    %2277 = vdwg.mxu0
    %2278 = vmatpush.bf16.msra.mxu0 %v2248
    %2279 = vmatpush.bf16.msra.mxu0 %v2247
    %2280 = vmatpush.bf16.msra.mxu0 %v2246
    %2281 = vmatpush.bf16.msra.mxu0 %v2245
    %2282 = vmatpush.bf16.msra.mxu0 %v2244
    %2283 = vmatpush.bf16.msra.mxu0 %v2243
    %2284 = vmatpush.bf16.msra.mxu0 %v2242
    %2285 = vmatpush.bf16.msra.mxu0 %v2241
    %2286 = vmatmul.bf16.gmra.mxu0 %v2164
    %v2287 = vpop.f32.mrf.mxu0
    %v2288 = vadd.f32 %v2275, %v2287
    %v2289 = vpop.f32.mrf.mxu0
    %2290 = vdwg.mxu0
    %2291 = vst [vmem:[#allocation31] sm:$0x3] %v2288
    // Predicated region
    $region182: #{tpu_custom_call.1} parent=1 // pred_check
      _
    $region183: #{tpu_custom_call.1} parent=1 // pred_check_branch
      %2293 = sbr.rel (0) target = $region185
    $region184: #{tpu_custom_call.1} parent=1 // pred_region
      %2295 = vsyncadd [#allocation4], 0
      %s2297 = sshll.u32 [#allocation31], 4
      %s2298 = int_to_ptr.vmem [resolvable:$true] %s2297
      %s2299 = sshll.u32 %s27, 4
      %s2300 = int_to_ptr.hbm [resolvable:$true] %s2299
      %2302 = dma.vmem_to_hbm [thread:$0]  %s2298, 32, %s2300, [#allocation4]
    $region185: #{tpu_custom_call.1} parent=1 // pred_fallthru
      _
    // Predicated region
    $region186: #{tpu_custom_call.1} parent=1 // pred_check
      _
    $region187: #{tpu_custom_call.1} parent=1 // pred_check_branch
      %2304 = sbr.rel (0) target = $region189
    $region188: #{tpu_custom_call.1} parent=1 // pred_region
      %2306 = dma.done [#allocation4], 32
    $region189: #{tpu_custom_call.1} parent=1 // pred_fallthru
      _
    %2307 = vsyncpa [#allocation3], 1
    %2308 = vsyncpa [#allocation6], 1
    %2309 = vsyncpa [#allocation9], 1
    %2310 = vsyncpa [#allocation12], 1
    %2311 = vsyncpa [#allocation15], 1
    %2312 = vsyncpa [#allocation18], 1
    %2313 = vsyncpa [#allocation21], 1
    %2314 = vsyncpa [#allocation24], 1
    %2315 = vsyncpa [#allocation27], 1
    %2316 = vsyncpa [#allocation30], 1
    %2317 = vsyncpa [#allocation4], 1

</llo_original>
